<compile_context>
chip_gen: v5e
topology: v5e:2x2
jax: 0.10.0
libtpu: 0.0.40
codegen_flags: <defaults>
</compile_context>

<pallas_src>
import math

import jax
import jax.numpy as jnp
import numpy as np
from jax.experimental import pallas as pl
from jax.experimental.pallas import tpu as pltpu

# ---------------- config (small, consistent with the module) ----------------
B = 2            # batch
S = 8            # sequence length
H = 4            # num_attention_heads
D = 8            # attention_head_size
HD = H * D       # hidden_size = all_head_size = 32
LN_EPS = 1e-12   # config.layer_norm_eps


# ---------------- fused kernel: QKV + attention + SelfOutput -----------------
def _fused_attention_kernel(h_ref, wqkv_ref, qb_ref, vb_ref, mask_ref,
                            relpos_ref, rel2d_ref, wout_ref, bout_ref,
                            gamma_ref, beta_ref, out_ref, probs_ref):
    # Per-batch-element blocks:
    #   h_ref (1,S,HD)   wqkv (HD,3HD)   qb/vb (1,HD)   mask (1,1,1,S)
    #   relpos/rel2d (1,H,S,S)   wout (HD,HD)   bout/gamma/beta (1,HD)
    #   out (1,S,HD)   probs (1,H,S,S)
    h2 = h_ref[...].reshape(S, HD)

    # One fused QKV matmul for this batch element: (S, HD) @ (HD, 3*HD).
    qkv = jnp.dot(h2, wqkv_ref[...], preferred_element_type=jnp.float32)

    scale = 1.0 / math.sqrt(D)
    q = (qkv[:, :HD] + qb_ref[...]) * scale          # q scaled once, right here
    k = qkv[:, HD:2 * HD]
    v = qkv[:, 2 * HD:] + vb_ref[...]

    # Head-major (H, S, D) assembled once; every matmul below is a single
    # batched dot_general over the head dim (no per-head MXU pushes).
    qh = jnp.stack([q[:, i * D:(i + 1) * D] for i in range(H)], axis=0)
    kh = jnp.stack([k[:, i * D:(i + 1) * D] for i in range(H)], axis=0)
    vh = jnp.stack([v[:, i * D:(i + 1) * D] for i in range(H)], axis=0)

    # Scores for all heads in one batched matmul (batch=H, contraction=D).
    scores = jnp.einsum('hqd,hkd->hqk', qh, kh,
                        preferred_element_type=jnp.float32)            # (H,S,S)

    # rel_pos + rel_2d_pos added in-kernel on the VPU (free under the matmuls).
    scores = scores + relpos_ref[...].reshape(H, S, S) \
                    + rel2d_ref[...].reshape(H, S, S)

    # masked_fill_(mask.bool(), -inf) -- matches the module; note a fully-masked
    # row yields NaN probs exactly like the PyTorch code.
    masked = mask_ref[...].reshape(1, 1, S) != 0.0
    scores = jnp.where(masked, -jnp.inf, scores)

    # fp32 softmax: EUP reciprocal + one Newton-Raphson step (rel err ~1e-7).
    m = jnp.max(scores, axis=-1, keepdims=True)
    e = jnp.exp(scores - m)
    denom = jnp.sum(e, axis=-1, keepdims=True)
    r = pl.reciprocal(denom, approx=True)
    r = r * (2.0 - denom * r)
    probs = e * r                                                       # (H,S,S)

    # Single full-width store of all heads' probs (no per-head strided writes).
    probs_ref[...] = probs.reshape(1, H, S, S)

    # Context for all heads in one batched matmul.
    ctx = jnp.einsum('hqk,hkd->hqd', probs, vh,
                     preferred_element_type=jnp.float32)                # (H,S,D)

    # SelfOutput dense without ever relayouting ctx to (S, HD):
    #   x[s,o] = sum_{h,d} ctx[h,s,d] * w_out[h*D+d, o]
    # done as a head-batched matmul against w_out viewed (H, D, HD), summed over h.
    wout_r = wout_ref[...].reshape(H, D, HD)
    xh = jnp.einsum('hsd,hdo->hso', ctx, wout_r,
                    preferred_element_type=jnp.float32)                 # (H,S,HD)
    x = jnp.sum(xh, axis=0) + bout_ref[...] + h2    # dense + bias + residual

    # LayerNorm (eps inside sqrt, biased variance -- matches nn.LayerNorm).
    mu = jnp.mean(x, axis=-1, keepdims=True)
    var = jnp.mean((x - mu) * (x - mu), axis=-1, keepdims=True)
    y = (x - mu) * jax.lax.rsqrt(var + LN_EPS) * gamma_ref[...] + beta_ref[...]
    out_ref[...] = y.reshape(1, S, HD)               # one full-width store


# ---------------- wrapper -----------------------------------------------------
@jax.jit
def layoutlmv2_attention(hidden, attention_mask, rel_pos, rel_2d_pos, params):
    # Weights / biases: whole-array blocks, resident across the grid.
    def full(shape):
        return pl.BlockSpec(shape, lambda b: (0,) * len(shape))

    grid_spec = pltpu.PrefetchScalarGridSpec(
        num_scalar_prefetch=0,
        grid=(B,),
        in_specs=[
            pl.BlockSpec((1, S, HD), lambda b: (b, 0, 0)),           # hidden
            full((HD, 3 * HD)),                                       # w_qkv
            full((1, HD)),                                            # q_bias
            full((1, HD)),                                            # v_bias
            pl.BlockSpec((1, 1, 1, S), lambda b: (b, 0, 0, 0)),       # attention_mask
            pl.BlockSpec((1, H, S, S), lambda b: (b, 0, 0, 0)),       # rel_pos
            pl.BlockSpec((1, H, S, S), lambda b: (b, 0, 0, 0)),       # rel_2d_pos
            full((HD, HD)),                                           # w_out
            full((1, HD)),                                            # b_out
            full((1, HD)),                                            # ln_gamma
            full((1, HD)),                                            # ln_beta
        ],
        out_specs=(
            pl.BlockSpec((1, S, HD), lambda b: (b, 0, 0)),            # attention_output
            pl.BlockSpec((1, H, S, S), lambda b: (b, 0, 0, 0)),       # attention_probs
        ),
    )

    out, probs = pl.pallas_call(
        _fused_attention_kernel,
        out_shape=(
            jax.ShapeDtypeStruct((B, S, HD), jnp.float32),
            jax.ShapeDtypeStruct((B, H, S, S), jnp.float32),
        ),
        grid_spec=grid_spec,
        compiler_params=pltpu.CompilerParams(
            dimension_semantics=("parallel",)),      # shard batch over TCs on v7x
    )(hidden, params["w_qkv"], params["q_bias"], params["v_bias"],
      attention_mask, rel_pos, rel_2d_pos, params["w_out"], params["b_out"],
      params["ln_gamma"], params["ln_beta"])
    return out, probs


# ---------------- pure-JAX reference (for correctness check) ------------------
def reference(hidden, mask, rel, rel2d, p):
    hp = jax.lax.Precision.HIGHEST
    qkv = jnp.einsum('bsh,ho->bso', hidden, p["w_qkv"], precision=hp)
    q = qkv[..., :HD] + p["q_bias"][0]
    k = qkv[..., HD:2 * HD]
    v = qkv[..., 2 * HD:] + p["v_bias"][0]

    def split(x):
        return x.reshape(B, S, H, D).transpose(0, 2, 1, 3)

    qh, kh, vh = split(q) / math.sqrt(D), split(k), split(v)
    scores = jnp.einsum("bhqd,bhkd->bhqk", qh, kh, precision=hp) + rel + rel2d
    scores = jnp.where(mask != 0.0, -jnp.inf, scores)
    probs = jax.nn.softmax(scores.astype(jnp.float32), axis=-1)
    ctx = jnp.einsum("bhqk,bhkd->bhqd", probs, vh, precision=hp)
    ctx = ctx.transpose(0, 2, 1, 3).reshape(B, S, HD)
    x = jnp.einsum('bsh,ho->bso', ctx, p["w_out"], precision=hp) + p["b_out"][0] + hidden
    mu = x.mean(-1, keepdims=True)
    var = ((x - mu) ** 2).mean(-1, keepdims=True)
    out = (x - mu) / jnp.sqrt(var + LN_EPS) * p["ln_gamma"][0] + p["ln_beta"][0]
    return out, probs


# ---------------- main ---------------------------------------------------------
if __name__ == "__main__":
    key = jax.random.PRNGKey(0)
    ks = jax.random.split(key, 10)

    # deterministic synthetic parameters (shapes from the module's __init__)
    params = {
        # fast_qkv: qkv_linear (no bias), stored (in, 3*out)
        "w_qkv": 0.05 * jax.random.normal(ks[0], (HD, 3 * HD), jnp.float32),
        "q_bias": 0.05 * jax.random.normal(ks[1], (1, HD), jnp.float32),
        "v_bias": 0.05 * jax.random.normal(ks[2], (1, HD), jnp.float32),
        # SelfOutput dense, stored (in, out)
        "w_out": 0.05 * jax.random.normal(ks[3], (HD, HD), jnp.float32),
        "b_out": 0.05 * jax.random.normal(ks[4], (1, HD), jnp.float32),
        # LayerNorm
        "ln_gamma": jnp.ones((1, HD), jnp.float32)
                    + 0.01 * jax.random.normal(ks[5], (1, HD), jnp.float32),
        "ln_beta": 0.01 * jax.random.normal(ks[6], (1, HD), jnp.float32),
    }

    hidden = jax.random.normal(ks[7], (B, S, HD), jnp.float32)
    rel_pos = 0.1 * jax.random.normal(ks[8], (B, H, S, S), jnp.float32)
    rel_2d_pos = 0.1 * jax.random.normal(ks[9], (B, H, S, S), jnp.float32)

    # mask: nonzero == masked (masked_fill semantics). Mask out last 2 keys of batch 1.
    mask = np.zeros((B, 1, 1, S), np.float32)
    mask[1, 0, 0, -2:] = 1.0
    mask = jnp.asarray(mask)

    out, probs = layoutlmv2_attention(hidden, mask, rel_pos, rel_2d_pos, params)
    jax.block_until_ready((out, probs))

    out_ref, probs_ref = reference(hidden, mask, rel_pos, rel_2d_pos, params)
    # Tolerance covers MXU f32 pass-decomposition differences vs the HIGHEST-precision
    # XLA reference (and the approx-reciprocal + NR softmax divide).
    np.testing.assert_allclose(np.asarray(out), np.asarray(out_ref),
                               rtol=2e-3, atol=2e-3)
    np.testing.assert_allclose(np.asarray(probs), np.asarray(probs_ref),
                               rtol=2e-3, atol=2e-3)

    print("KERNEL_OK")
</pallas_src>

<mosaic_0001>
module attributes {stable_mosaic.version = 11 : i64} {
  func.func @_fused_attention_kernel(%arg0: i32, %arg1: memref<1x8x32xf32, #tpu.memory_space<vmem>>, %arg2: memref<32x96xf32, #tpu.memory_space<vmem>>, %arg3: memref<1x32xf32, #tpu.memory_space<vmem>>, %arg4: memref<1x32xf32, #tpu.memory_space<vmem>>, %arg5: memref<1x1x1x8xf32, #tpu.memory_space<vmem>>, %arg6: memref<1x4x8x8xf32, #tpu.memory_space<vmem>>, %arg7: memref<1x4x8x8xf32, #tpu.memory_space<vmem>>, %arg8: memref<32x32xf32, #tpu.memory_space<vmem>>, %arg9: memref<1x32xf32, #tpu.memory_space<vmem>>, %arg10: memref<1x32xf32, #tpu.memory_space<vmem>>, %arg11: memref<1x32xf32, #tpu.memory_space<vmem>>, %arg12: memref<1x8x32xf32, #tpu.memory_space<vmem>>, %arg13: memref<1x4x8x8xf32, #tpu.memory_space<vmem>>) attributes {dimension_semantics = [#tpu.dimension_semantics<parallel>], iteration_bounds = array<i64: 2>, scalar_prefetch = 0 : i64, scratch_operands = 0 : i64, tpu.core_type = #tpu.core_type<tc>, window_params = [{transform_indices = @transform_0, window_bounds = array<i64: 1, 8, 32>}, {pipeline_mode = #tpu.pipeline_mode<synchronous>, transform_indices = @transform_1, window_bounds = array<i64: 32, 96>}, {pipeline_mode = #tpu.pipeline_mode<synchronous>, transform_indices = @transform_2, window_bounds = array<i64: 1, 32>}, {pipeline_mode = #tpu.pipeline_mode<synchronous>, transform_indices = @transform_3, window_bounds = array<i64: 1, 32>}, {transform_indices = @transform_4, window_bounds = array<i64: 1, 1, 1, 8>}, {transform_indices = @transform_5, window_bounds = array<i64: 1, 4, 8, 8>}, {transform_indices = @transform_6, window_bounds = array<i64: 1, 4, 8, 8>}, {pipeline_mode = #tpu.pipeline_mode<synchronous>, transform_indices = @transform_7, window_bounds = array<i64: 32, 32>}, {pipeline_mode = #tpu.pipeline_mode<synchronous>, transform_indices = @transform_8, window_bounds = array<i64: 1, 32>}, {pipeline_mode = #tpu.pipeline_mode<synchronous>, transform_indices = @transform_9, window_bounds = array<i64: 1, 32>}, {pipeline_mode = #tpu.pipeline_mode<synchronous>, transform_indices = @transform_10, window_bounds = array<i64: 1, 32>}, {transform_indices = @transform_11, window_bounds = array<i64: 1, 8, 32>}, {transform_indices = @transform_12, window_bounds = array<i64: 1, 4, 8, 8>}]} {
    %c0 = arith.constant 0 : index
    %c0_0 = arith.constant 0 : index
    %c0_1 = arith.constant 0 : index
    %0 = vector.load %arg1[%c0, %c0_0, %c0_1] : memref<1x8x32xf32, #tpu.memory_space<vmem>>, vector<1x8x32xf32>
    %1 = vector.shape_cast %0 : vector<1x8x32xf32> to vector<8x32xf32>
    %c0_2 = arith.constant 0 : index
    %c0_3 = arith.constant 0 : index
    %2 = vector.load %arg2[%c0_2, %c0_3] : memref<32x96xf32, #tpu.memory_space<vmem>>, vector<32x96xf32>
    %cst = arith.constant dense<0.000000e+00> : vector<8x96xf32>
    %3 = tpu.matmul %1, %2, %cst {dimension_numbers = #tpu.dot_dimension_numbers<[1], [0], [0], [1], [0, 0, 1, 1], [], []>} : vector<8x32xf32>, vector<32x96xf32>, vector<8x96xf32> -> vector<8x96xf32>
    %4 = vector.extract_strided_slice %3 {offsets = [0, 0], sizes = [8, 32], strides = [1, 1]} : vector<8x96xf32> to vector<8x32xf32>
    %c0_4 = arith.constant 0 : index
    %c0_5 = arith.constant 0 : index
    %5 = vector.load %arg3[%c0_4, %c0_5] : memref<1x32xf32, #tpu.memory_space<vmem>>, vector<1x32xf32>
    %6 = vector.broadcast %5 : vector<1x32xf32> to vector<8x32xf32>
    %7 = arith.addf %4, %6 : vector<8x32xf32>
    %cst_6 = arith.constant 0.353553385 : f32
    %8 = vector.broadcast %cst_6 : f32 to vector<8x32xf32>
    %9 = arith.mulf %7, %8 : vector<8x32xf32>
    %10 = vector.extract_strided_slice %3 {offsets = [0, 32], sizes = [8, 32], strides = [1, 1]} : vector<8x96xf32> to vector<8x32xf32>
    %11 = vector.extract_strided_slice %3 {offsets = [0, 64], sizes = [8, 32], strides = [1, 1]} : vector<8x96xf32> to vector<8x32xf32>
    %c0_7 = arith.constant 0 : index
    %c0_8 = arith.constant 0 : index
    %12 = vector.load %arg4[%c0_7, %c0_8] : memref<1x32xf32, #tpu.memory_space<vmem>>, vector<1x32xf32>
    %13 = vector.broadcast %12 : vector<1x32xf32> to vector<8x32xf32>
    %14 = arith.addf %11, %13 : vector<8x32xf32>
    %15 = vector.extract_strided_slice %9 {offsets = [0, 0], sizes = [8, 8], strides = [1, 1]} : vector<8x32xf32> to vector<8x8xf32>
    %16 = vector.extract_strided_slice %9 {offsets = [0, 8], sizes = [8, 8], strides = [1, 1]} : vector<8x32xf32> to vector<8x8xf32>
    %17 = vector.extract_strided_slice %9 {offsets = [0, 16], sizes = [8, 8], strides = [1, 1]} : vector<8x32xf32> to vector<8x8xf32>
    %18 = vector.extract_strided_slice %9 {offsets = [0, 24], sizes = [8, 8], strides = [1, 1]} : vector<8x32xf32> to vector<8x8xf32>
    %19 = vector.shape_cast %15 : vector<8x8xf32> to vector<1x8x8xf32>
    %20 = vector.shape_cast %16 : vector<8x8xf32> to vector<1x8x8xf32>
    %21 = vector.shape_cast %17 : vector<8x8xf32> to vector<1x8x8xf32>
    %22 = vector.shape_cast %18 : vector<8x8xf32> to vector<1x8x8xf32>
    %23 = tpu.concatenate %19, %20, %21, %22 in 0 : vector<1x8x8xf32>, vector<1x8x8xf32>, vector<1x8x8xf32>, vector<1x8x8xf32> -> vector<4x8x8xf32>
    %24 = vector.extract_strided_slice %10 {offsets = [0, 0], sizes = [8, 8], strides = [1, 1]} : vector<8x32xf32> to vector<8x8xf32>
    %25 = vector.extract_strided_slice %10 {offsets = [0, 8], sizes = [8, 8], strides = [1, 1]} : vector<8x32xf32> to vector<8x8xf32>
    %26 = vector.extract_strided_slice %10 {offsets = [0, 16], sizes = [8, 8], strides = [1, 1]} : vector<8x32xf32> to vector<8x8xf32>
    %27 = vector.extract_strided_slice %10 {offsets = [0, 24], sizes = [8, 8], strides = [1, 1]} : vector<8x32xf32> to vector<8x8xf32>
    %28 = vector.shape_cast %24 : vector<8x8xf32> to vector<1x8x8xf32>
    %29 = vector.shape_cast %25 : vector<8x8xf32> to vector<1x8x8xf32>
    %30 = vector.shape_cast %26 : vector<8x8xf32> to vector<1x8x8xf32>
    %31 = vector.shape_cast %27 : vector<8x8xf32> to vector<1x8x8xf32>
    %32 = tpu.concatenate %28, %29, %30, %31 in 0 : vector<1x8x8xf32>, vector<1x8x8xf32>, vector<1x8x8xf32>, vector<1x8x8xf32> -> vector<4x8x8xf32>
    %33 = vector.extract_strided_slice %14 {offsets = [0, 0], sizes = [8, 8], strides = [1, 1]} : vector<8x32xf32> to vector<8x8xf32>
    %34 = vector.extract_strided_slice %14 {offsets = [0, 8], sizes = [8, 8], strides = [1, 1]} : vector<8x32xf32> to vector<8x8xf32>
    %35 = vector.extract_strided_slice %14 {offsets = [0, 16], sizes = [8, 8], strides = [1, 1]} : vector<8x32xf32> to vector<8x8xf32>
    %36 = vector.extract_strided_slice %14 {offsets = [0, 24], sizes = [8, 8], strides = [1, 1]} : vector<8x32xf32> to vector<8x8xf32>
    %37 = vector.shape_cast %33 : vector<8x8xf32> to vector<1x8x8xf32>
    %38 = vector.shape_cast %34 : vector<8x8xf32> to vector<1x8x8xf32>
    %39 = vector.shape_cast %35 : vector<8x8xf32> to vector<1x8x8xf32>
    %40 = vector.shape_cast %36 : vector<8x8xf32> to vector<1x8x8xf32>
    %41 = tpu.concatenate %37, %38, %39, %40 in 0 : vector<1x8x8xf32>, vector<1x8x8xf32>, vector<1x8x8xf32>, vector<1x8x8xf32> -> vector<4x8x8xf32>
    "tpu.trace_start"() <{level = 10 : i32, message = "hqd,hkd->hqk"}> : () -> ()
    %cst_9 = arith.constant dense<0.000000e+00> : vector<4x8x8xf32>
    %42 = tpu.matmul %23, %32, %cst_9 {dimension_numbers = #tpu.dot_dimension_numbers<[2], [2], [1], [1], [0, 0, 0, 1, 1, 1], [0], [0]>} : vector<4x8x8xf32>, vector<4x8x8xf32>, vector<4x8x8xf32> -> vector<4x8x8xf32>
    "tpu.trace_stop"() : () -> ()
    %c0_10 = arith.constant 0 : index
    %c0_11 = arith.constant 0 : index
    %c0_12 = arith.constant 0 : index
    %c0_13 = arith.constant 0 : index
    %43 = vector.load %arg6[%c0_10, %c0_11, %c0_12, %c0_13] : memref<1x4x8x8xf32, #tpu.memory_space<vmem>>, vector<1x4x8x8xf32>
    %44 = vector.shape_cast %43 : vector<1x4x8x8xf32> to vector<4x8x8xf32>
    %45 = arith.addf %42, %44 : vector<4x8x8xf32>
    %c0_14 = arith.constant 0 : index
    %c0_15 = arith.constant 0 : index
    %c0_16 = arith.constant 0 : index
    %c0_17 = arith.constant 0 : index
    %46 = vector.load %arg7[%c0_14, %c0_15, %c0_16, %c0_17] : memref<1x4x8x8xf32, #tpu.memory_space<vmem>>, vector<1x4x8x8xf32>
    %47 = vector.shape_cast %46 : vector<1x4x8x8xf32> to vector<4x8x8xf32>
    %48 = arith.addf %45, %47 : vector<4x8x8xf32>
    %c0_18 = arith.constant 0 : index
    %c0_19 = arith.constant 0 : index
    %c0_20 = arith.constant 0 : index
    %c0_21 = arith.constant 0 : index
    %49 = vector.load %arg5[%c0_18, %c0_19, %c0_20, %c0_21] : memref<1x1x1x8xf32, #tpu.memory_space<vmem>>, vector<1x1x1x8xf32>
    %50 = vector.shape_cast %49 : vector<1x1x1x8xf32> to vector<1x1x8xf32>
    %cst_22 = arith.constant 0.000000e+00 : f32
    %51 = vector.broadcast %cst_22 : f32 to vector<1x1x8xf32>
    %52 = arith.cmpf one, %50, %51 : vector<1x1x8xf32>
    %cst_23 = arith.constant 0xFF800000 : f32
    %53 = vector.shape_cast %52 : vector<1x1x8xi1> to vector<1x1x8xi1>
    %54 = vector.broadcast %53 : vector<1x1x8xi1> to vector<4x8x8xi1>
    %55 = vector.broadcast %cst_23 : f32 to vector<4x8x8xf32>
    %56 = arith.select %54, %55, %48 : vector<4x8x8xi1>, vector<4x8x8xf32>
    %cst_24 = arith.constant dense<0xFF800000> : vector<4x8xf32>
    %57 = vector.multi_reduction <maximumf>, %56, %cst_24 [2] : vector<4x8x8xf32> to vector<4x8xf32>
    %58 = vector.shape_cast %57 : vector<4x8xf32> to vector<4x8x1xf32>
    %59 = vector.broadcast %58 : vector<4x8x1xf32> to vector<4x8x8xf32>
    %60 = arith.subf %56, %59 : vector<4x8x8xf32>
    %61 = math.exp %60 : vector<4x8x8xf32>
    %cst_25 = arith.constant dense<0.000000e+00> : vector<4x8xf32>
    %62 = vector.multi_reduction <add>, %61, %cst_25 [2] : vector<4x8x8xf32> to vector<4x8xf32>
    %63 = vector.shape_cast %62 : vector<4x8xf32> to vector<4x8x1xf32>
    %64 = tpu.reciprocal %63 {approx = true} : vector<4x8x1xf32> -> vector<4x8x1xf32>
    %65 = arith.mulf %63, %64 : vector<4x8x1xf32>
    %cst_26 = arith.constant 2.000000e+00 : f32
    %66 = vector.broadcast %cst_26 : f32 to vector<4x8x1xf32>
    %67 = arith.subf %66, %65 : vector<4x8x1xf32>
    %68 = arith.mulf %64, %67 : vector<4x8x1xf32>
    %69 = vector.broadcast %68 : vector<4x8x1xf32> to vector<4x8x8xf32>
    %70 = arith.mulf %61, %69 : vector<4x8x8xf32>
    %71 = vector.shape_cast %70 : vector<4x8x8xf32> to vector<1x4x8x8xf32>
    %c0_27 = arith.constant 0 : index
    %c0_28 = arith.constant 0 : index
    %c0_29 = arith.constant 0 : index
    %c0_30 = arith.constant 0 : index
    %72 = vector.load %arg13[%c0_27, %c0_28, %c0_29, %c0_30] : memref<1x4x8x8xf32, #tpu.memory_space<vmem>>, vector<1x4x8x8xf32>
    tpu.vector_store %arg13[%c0_27, %c0_28, %c0_29, %c0_30], %71 {strides = array<i32>} : memref<1x4x8x8xf32, #tpu.memory_space<vmem>>, vector<1x4x8x8xf32>,
    "tpu.trace_start"() <{level = 10 : i32, message = "hqk,hkd->hqd"}> : () -> ()
    %cst_31 = arith.constant dense<0.000000e+00> : vector<4x8x8xf32>
    %73 = tpu.matmul %70, %41, %cst_31 {dimension_numbers = #tpu.dot_dimension_numbers<[2], [1], [1], [2], [0, 0, 0, 1, 1, 2], [0], [0]>} : vector<4x8x8xf32>, vector<4x8x8xf32>, vector<4x8x8xf32> -> vector<4x8x8xf32>
    "tpu.trace_stop"() : () -> ()
    %c0_32 = arith.constant 0 : index
    %c0_33 = arith.constant 0 : index
    %74 = vector.load %arg8[%c0_32, %c0_33] : memref<32x32xf32, #tpu.memory_space<vmem>>, vector<32x32xf32>
    %75 = vector.shape_cast %74 : vector<32x32xf32> to vector<4x8x32xf32>
    "tpu.trace_start"() <{level = 10 : i32, message = "hsd,hdo->hso"}> : () -> ()
    %cst_34 = arith.constant dense<0.000000e+00> : vector<4x8x32xf32>
    %76 = tpu.matmul %73, %75, %cst_34 {dimension_numbers = #tpu.dot_dimension_numbers<[2], [1], [1], [2], [0, 0, 0, 1, 1, 2], [0], [0]>} : vector<4x8x8xf32>, vector<4x8x32xf32>, vector<4x8x32xf32> -> vector<4x8x32xf32>
    "tpu.trace_stop"() : () -> ()
    %cst_35 = arith.constant dense<0.000000e+00> : vector<8x32xf32>
    %77 = vector.multi_reduction <add>, %76, %cst_35 [0] : vector<4x8x32xf32> to vector<8x32xf32>
    %c0_36 = arith.constant 0 : index
    %c0_37 = arith.constant 0 : index
    %78 = vector.load %arg9[%c0_36, %c0_37] : memref<1x32xf32, #tpu.memory_space<vmem>>, vector<1x32xf32>
    %79 = vector.broadcast %78 : vector<1x32xf32> to vector<8x32xf32>
    %80 = arith.addf %77, %79 : vector<8x32xf32>
    %81 = arith.addf %80, %1 : vector<8x32xf32>
    %cst_38 = arith.constant dense<0.000000e+00> : vector<8xf32>
    %82 = vector.multi_reduction <add>, %81, %cst_38 [1] : vector<8x32xf32> to vector<8xf32>
    %83 = vector.shape_cast %82 : vector<8xf32> to vector<8x1xf32>
    %cst_39 = arith.constant 3.200000e+01 : f32
    %84 = vector.broadcast %cst_39 : f32 to vector<8x1xf32>
    %85 = arith.divf %83, %84 : vector<8x1xf32>
    %86 = vector.broadcast %85 : vector<8x1xf32> to vector<8x32xf32>
    %87 = arith.subf %81, %86 : vector<8x32xf32>
    %88 = vector.broadcast %85 : vector<8x1xf32> to vector<8x32xf32>
    %89 = arith.subf %81, %88 : vector<8x32xf32>
    %90 = arith.mulf %87, %89 : vector<8x32xf32>
    %cst_40 = arith.constant dense<0.000000e+00> : vector<8xf32>
    %91 = vector.multi_reduction <add>, %90, %cst_40 [1] : vector<8x32xf32> to vector<8xf32>
    %92 = vector.shape_cast %91 : vector<8xf32> to vector<8x1xf32>
    %cst_41 = arith.constant 3.200000e+01 : f32
    %93 = vector.broadcast %cst_41 : f32 to vector<8x1xf32>
    %94 = arith.divf %92, %93 : vector<8x1xf32>
    %95 = vector.broadcast %85 : vector<8x1xf32> to vector<8x32xf32>
    %96 = arith.subf %81, %95 : vector<8x32xf32>
    %cst_42 = arith.constant 9.99999996E-13 : f32
    %97 = vector.broadcast %cst_42 : f32 to vector<8x1xf32>
    %98 = arith.addf %94, %97 : vector<8x1xf32>
    %99 = math.rsqrt %98 : vector<8x1xf32>
    %100 = vector.broadcast %99 : vector<8x1xf32> to vector<8x32xf32>
    %101 = arith.mulf %96, %100 : vector<8x32xf32>
    %c0_43 = arith.constant 0 : index
    %c0_44 = arith.constant 0 : index
    %102 = vector.load %arg10[%c0_43, %c0_44] : memref<1x32xf32, #tpu.memory_space<vmem>>, vector<1x32xf32>
    %103 = vector.broadcast %102 : vector<1x32xf32> to vector<8x32xf32>
    %104 = arith.mulf %101, %103 : vector<8x32xf32>
    %c0_45 = arith.constant 0 : index
    %c0_46 = arith.constant 0 : index
    %105 = vector.load %arg11[%c0_45, %c0_46] : memref<1x32xf32, #tpu.memory_space<vmem>>, vector<1x32xf32>
    %106 = vector.broadcast %105 : vector<1x32xf32> to vector<8x32xf32>
    %107 = arith.addf %104, %106 : vector<8x32xf32>
    %108 = vector.shape_cast %107 : vector<8x32xf32> to vector<1x8x32xf32>
    %c0_47 = arith.constant 0 : index
    %c0_48 = arith.constant 0 : index
    %c0_49 = arith.constant 0 : index
    %109 = vector.load %arg12[%c0_47, %c0_48, %c0_49] : memref<1x8x32xf32, #tpu.memory_space<vmem>>, vector<1x8x32xf32>
    tpu.vector_store %arg12[%c0_47, %c0_48, %c0_49], %108 {strides = array<i32>} : memref<1x8x32xf32, #tpu.memory_space<vmem>>, vector<1x8x32xf32>,
    return
  }
  func.func @transform_0(%arg0: i32) -> (i32, i32, i32) {
    %c0_i32 = arith.constant 0 : i32
    %c0_i32_0 = arith.constant 0 : i32
    %c0_i32_1 = arith.constant 0 : i32
    return %arg0, %c0_i32, %c0_i32_0 : i32, i32, i32
  }
  func.func @transform_1(%arg0: i32) -> (i32, i32) {
    %c0_i32 = arith.constant 0 : i32
    %c0_i32_0 = arith.constant 0 : i32
    %c0_i32_1 = arith.constant 0 : i32
    return %c0_i32, %c0_i32_0 : i32, i32
  }
  func.func @transform_2(%arg0: i32) -> (i32, i32) {
    %c0_i32 = arith.constant 0 : i32
    %c0_i32_0 = arith.constant 0 : i32
    %c0_i32_1 = arith.constant 0 : i32
    return %c0_i32, %c0_i32_0 : i32, i32
  }
  func.func @transform_3(%arg0: i32) -> (i32, i32) {
    %c0_i32 = arith.constant 0 : i32
    %c0_i32_0 = arith.constant 0 : i32
    %c0_i32_1 = arith.constant 0 : i32
    return %c0_i32, %c0_i32_0 : i32, i32
  }
  func.func @transform_4(%arg0: i32) -> (i32, i32, i32, i32) {
    %c0_i32 = arith.constant 0 : i32
    %c0_i32_0 = arith.constant 0 : i32
    %c0_i32_1 = arith.constant 0 : i32
    %c0_i32_2 = arith.constant 0 : i32
    return %arg0, %c0_i32, %c0_i32_0, %c0_i32_1 : i32, i32, i32, i32
  }
  func.func @transform_5(%arg0: i32) -> (i32, i32, i32, i32) {
    %c0_i32 = arith.constant 0 : i32
    %c0_i32_0 = arith.constant 0 : i32
    %c0_i32_1 = arith.constant 0 : i32
    %c0_i32_2 = arith.constant 0 : i32
    return %arg0, %c0_i32, %c0_i32_0, %c0_i32_1 : i32, i32, i32, i32
  }
  func.func @transform_6(%arg0: i32) -> (i32, i32, i32, i32) {
    %c0_i32 = arith.constant 0 : i32
    %c0_i32_0 = arith.constant 0 : i32
    %c0_i32_1 = arith.constant 0 : i32
    %c0_i32_2 = arith.constant 0 : i32
    return %arg0, %c0_i32, %c0_i32_0, %c0_i32_1 : i32, i32, i32, i32
  }
  func.func @transform_7(%arg0: i32) -> (i32, i32) {
    %c0_i32 = arith.constant 0 : i32
    %c0_i32_0 = arith.constant 0 : i32
    %c0_i32_1 = arith.constant 0 : i32
    return %c0_i32, %c0_i32_0 : i32, i32
  }
  func.func @transform_8(%arg0: i32) -> (i32, i32) {
    %c0_i32 = arith.constant 0 : i32
    %c0_i32_0 = arith.constant 0 : i32
    %c0_i32_1 = arith.constant 0 : i32
    return %c0_i32, %c0_i32_0 : i32, i32
  }
  func.func @transform_9(%arg0: i32) -> (i32, i32) {
    %c0_i32 = arith.constant 0 : i32
    %c0_i32_0 = arith.constant 0 : i32
    %c0_i32_1 = arith.constant 0 : i32
    return %c0_i32, %c0_i32_0 : i32, i32
  }
  func.func @transform_10(%arg0: i32) -> (i32, i32) {
    %c0_i32 = arith.constant 0 : i32
    %c0_i32_0 = arith.constant 0 : i32
    %c0_i32_1 = arith.constant 0 : i32
    return %c0_i32, %c0_i32_0 : i32, i32
  }
  func.func @transform_11(%arg0: i32) -> (i32, i32, i32) {
    %c0_i32 = arith.constant 0 : i32
    %c0_i32_0 = arith.constant 0 : i32
    %c0_i32_1 = arith.constant 0 : i32
    return %arg0, %c0_i32, %c0_i32_0 : i32, i32, i32
  }
  func.func @transform_12(%arg0: i32) -> (i32, i32, i32, i32) {
    %c0_i32 = arith.constant 0 : i32
    %c0_i32_0 = arith.constant 0 : i32
    %c0_i32_1 = arith.constant 0 : i32
    %c0_i32_2 = arith.constant 0 : i32
    return %arg0, %c0_i32, %c0_i32_0, %c0_i32_1 : i32, i32, i32, i32
  }
}

</mosaic_0001>

<llo_original>
// kernel: layoutlmv2_attention.1
$region0: #{layoutlmv2_attention.1}
  #allocation0 [shape = 'u32[]', space=smem, size = 0x4, offset = 0x4, fixed_abs, tag = 'smem constant byte address 0x4 - core index']
  #allocation1 [shape = 'u32[72,128]{1,0:T(1,128)}', space=vmem, size = 0x9000, scoped, tag = 'internal scratch']
  %s0 = inlined_call_operand.hbm [shape: f32[2,8,32], index: 0, kind: input, shape index: {}]
  %s1 = inlined_call_operand.hbm [shape: f32[32,96], index: 1, kind: input, shape index: {}]
  %s2 = inlined_call_operand.vmem [shape: f32[1,32], index: 2, kind: input, shape index: {}]
  %s3 = inlined_call_operand.vmem [shape: f32[1,32], index: 3, kind: input, shape index: {}]
  %s4 = inlined_call_operand.hbm [shape: f32[2,1,1,8], index: 4, kind: input, shape index: {}]
  %s5 = inlined_call_operand.hbm [shape: f32[2,4,8,8], index: 5, kind: input, shape index: {}]
  %s6 = inlined_call_operand.hbm [shape: f32[2,4,8,8], index: 6, kind: input, shape index: {}]
  %s7 = inlined_call_operand.hbm [shape: f32[32,32], index: 7, kind: input, shape index: {}]
  %s8 = inlined_call_operand.vmem [shape: f32[1,32], index: 8, kind: input, shape index: {}]
  %s9 = inlined_call_operand.vmem [shape: f32[1,32], index: 9, kind: input, shape index: {}]
  %s10 = inlined_call_operand.hbm [shape: f32[1,32], index: 10, kind: input, shape index: {}]
  %s11 = inlined_call_operand.hbm [shape: f32[2,8,32], index: 11, kind: output, shape index: {0}]
  %s12 = inlined_call_operand.hbm [shape: f32[2,4,8,8], index: 12, kind: output, shape index: {1}]
  %13 = xla_tuple %s11, %s12
  %s14 = sld [smem:[#allocation0]]
  $region113: #{layoutlmv2_attention.1} parent=0
    _
  %s16 = ssub.s32 1, %s14
  %s17 = scalar_select 0, %s16, %s14
  $region1: #{layoutlmv2_attention.1} parent=0
    #allocation2 [shape = 'u8[8192]{0}', space=vmem, size = 0x2000, scoped, tag = 'input window, operand 0']
    #allocation3 [shape = 's32[2]{0}', space=sflag, size = 0x8, scoped, tag = 'scoped memory for layoutlmv2_attention.1']
    #allocation4 [shape = 's32[2]{0}', space=sflag, size = 0x8, scoped, tag = 'scoped memory for layoutlmv2_attention.1']
    #allocation5 [shape = 'u8[16384]{0}', space=vmem, size = 0x4000, scoped, tag = 'input window, operand 1, single buffered']
    #allocation6 [shape = 's32[1]{0}', space=sflag, size = 0x4, scoped, tag = 'scoped memory for layoutlmv2_attention.1']
    #allocation7 [shape = 'u8[1024]{0}', space=vmem, size = 0x400, scoped, tag = 'input window, operand 4']
    #allocation8 [shape = 'u8[32768]{0}', space=vmem, size = 0x8000, scoped, tag = 'input window, operand 5']
    #allocation9 [shape = 'u8[32768]{0}', space=vmem, size = 0x8000, scoped, tag = 'input window, operand 6']
    #allocation10 [shape = 'u8[16384]{0}', space=vmem, size = 0x4000, scoped, tag = 'input window, operand 7, single buffered']
    #allocation11 [shape = 'u8[512]{0}', space=vmem, size = 0x400, scoped, tag = 'input window, operand 10, single buffered']
    #allocation12 [shape = 's32[1]{0}', space=sflag, size = 0x4, scoped, tag = 'scoped memory for layoutlmv2_attention.1']
    #allocation13 [shape = 'u8[8192]{0}', space=vmem, size = 0x2000, scoped, tag = 'output window, operand 0']
    #allocation14 [shape = 'u8[32768]{0}', space=vmem, size = 0x8000, scoped, tag = 'output window, operand 1']
    #allocation15 [shape = 's32[2]{0}', space=sflag, size = 0x8, scoped, tag = 'scoped memory for layoutlmv2_attention.1']
    %18 = vsyncpa [#allocation3], 0
    %s19 = scalar_lea.sflag [#allocation3], 1
    %20 = vsyncpa %s19, 0
    %21 = vsyncpa [#allocation6], 0
    %22 = vsyncpa [#allocation12], 0
    %23 = vsyncpa [#allocation4], 0
    %s24 = scalar_lea.sflag [#allocation4], 1
    %25 = vsyncpa %s24, 0
    %26 = vsyncpa [#allocation15], 0
    %s27 = scalar_lea.sflag [#allocation15], 1
    %28 = vsyncpa %s27, 0
    loop: start=0, step=1, limit=4
    $region2: #{layoutlmv2_attention.1} parent=1 // loop_pre_header
      _
    $region3: #{layoutlmv2_attention.1} parent=1 // loop_header
      %s30 = sphi 0, %s34
      %p31 = scmp.ge.s32.totalorder %s30, 4
      %s40 = sphi 0, %s42
      %s43 = sphi 0, %s40
      %s44 = sphi 0, %s43
      %s60 = sphi 0, %s44
      %s64 = sphi 0, %s64
      %s66 = sphi 0, %s64
      %s67 = sphi 0, %s66
      %s81 = sphi 0, %s67
      %s85 = sphi 0, %s85
      %s87 = sphi 0, %s85
      %s88 = sphi 0, %s87
      %s102 = sphi 0, %s88
      %s106 = sphi 0, %s106
      %s108 = sphi 0, %s106
      %s109 = sphi 0, %s108
      %s123 = sphi 0, %s109
      %s129 = sphi 0, %s131
      %s132 = sphi 0, %s129
      %s133 = sphi 0, %s132
      %s149 = sphi 0, %s133
      %s155 = sphi 0, %s157
      %s158 = sphi 0, %s155
      %s159 = sphi 0, %s158
      %s175 = sphi 0, %s159
      %s181 = sphi 0, %s183
      %s184 = sphi 0, %s181
      %s185 = sphi 0, %s184
      %s201 = sphi 0, %s185
      %s205 = sphi 0, %s205
      %s207 = sphi 0, %s205
      %s208 = sphi 0, %s207
      %s222 = sphi 0, %s208
      %s226 = sphi 0, %s226
      %s228 = sphi 0, %s226
      %s229 = sphi 0, %s228
      %s243 = sphi 0, %s229
      %s247 = sphi 0, %s247
      %s249 = sphi 0, %s247
      %s250 = sphi 0, %s249
      %s264 = sphi 0, %s250
      %s268 = sphi 0, %s268
      %s270 = sphi 0, %s268
      %s271 = sphi 0, %s270
      %s285 = sphi 0, %s271
      %s291 = sphi 0, %s293
      %s294 = sphi 0, %s291
      %s295 = sphi 0, %s294
      %s311 = sphi 0, %s295
      %s317 = sphi 0, %s319
      %s320 = sphi 0, %s317
      %s321 = sphi 0, %s320
      %s337 = sphi 0, %s321
    $region4: #{layoutlmv2_attention.1} parent=1 // loop_header_branch
      %33 = sbr.rel (%p31) target = $region8
    $region5: #{layoutlmv2_attention.1} parent=1 // loop_body
      %s35 = ssub.s32 %s30, 1
      %s36 = ssub.s32 %s30, 2
      %s37 = sadd.s32 %s30, 1
      %s38 = ssub.s32 %s30, %s37
      %p39 = scmp.eq.s32.totalorder %s38, 0
      %s41 = sadd.s32 %s40, 1
      %s42 = scalar_select %p39, %s40, %s41
      %p45 = pneg %p39
      %p46 = scmp.eq.s32.totalorder %s30, 1
      %p47 = por %p45, %p46
      %p48 = scmp.ne.s32.totalorder %s40, %s43
      %p49 = scmp.eq.s32.totalorder %s30, 0
      %p50 = por %p48, %p49
      %p51 = scmp.ne.s32.totalorder %s40, %s43
      %p52 = scmp.eq.s32.totalorder %s35, 1
      %p53 = por %p51, %p52
      %p54 = scmp.ne.s32.totalorder %s43, %s44
      %p55 = scmp.eq.s32.totalorder %s35, 0
      %p56 = por %p54, %p55
      %p57 = scmp.ne.s32.totalorder %s43, %s44
      %p58 = scmp.eq.s32.totalorder %s36, 1
      %p59 = por %p57, %p58
      %p61 = scmp.ne.s32.totalorder %s44, %s60
      %p62 = scmp.eq.s32.totalorder %s36, 0
      %p63 = por %p61, %p62
      %s65 = sadd.s32 %s64, 1
      %p68 = scmp.eq.s32.totalorder %s30, 1
      %p69 = scmp.ne.s32.totalorder %s64, %s66
      %p70 = scmp.eq.s32.totalorder %s30, 0
      %p71 = por %p69, %p70
      %p72 = scmp.ne.s32.totalorder %s64, %s66
      %p73 = scmp.eq.s32.totalorder %s35, 1
      %p74 = por %p72, %p73
      %p75 = scmp.ne.s32.totalorder %s66, %s67
      %p76 = scmp.eq.s32.totalorder %s35, 0
      %p77 = por %p75, %p76
      %p78 = scmp.ne.s32.totalorder %s66, %s67
      %p79 = scmp.eq.s32.totalorder %s36, 1
      %p80 = por %p78, %p79
      %p82 = scmp.ne.s32.totalorder %s67, %s81
      %p83 = scmp.eq.s32.totalorder %s36, 0
      %p84 = por %p82, %p83
      %s86 = sadd.s32 %s85, 1
      %p89 = scmp.eq.s32.totalorder %s30, 1
      %p90 = scmp.ne.s32.totalorder %s85, %s87
      %p91 = scmp.eq.s32.totalorder %s30, 0
      %p92 = por %p90, %p91
      %p93 = scmp.ne.s32.totalorder %s85, %s87
      %p94 = scmp.eq.s32.totalorder %s35, 1
      %p95 = por %p93, %p94
      %p96 = scmp.ne.s32.totalorder %s87, %s88
      %p97 = scmp.eq.s32.totalorder %s35, 0
      %p98 = por %p96, %p97
      %p99 = scmp.ne.s32.totalorder %s87, %s88
      %p100 = scmp.eq.s32.totalorder %s36, 1
      %p101 = por %p99, %p100
      %p103 = scmp.ne.s32.totalorder %s88, %s102
      %p104 = scmp.eq.s32.totalorder %s36, 0
      %p105 = por %p103, %p104
      %s107 = sadd.s32 %s106, 1
      %p110 = scmp.eq.s32.totalorder %s30, 1
      %p111 = scmp.ne.s32.totalorder %s106, %s108
      %p112 = scmp.eq.s32.totalorder %s30, 0
      %p113 = por %p111, %p112
      %p114 = scmp.ne.s32.totalorder %s106, %s108
      %p115 = scmp.eq.s32.totalorder %s35, 1
      %p116 = por %p114, %p115
      %p117 = scmp.ne.s32.totalorder %s108, %s109
      %p118 = scmp.eq.s32.totalorder %s35, 0
      %p119 = por %p117, %p118
      %p120 = scmp.ne.s32.totalorder %s108, %s109
      %p121 = scmp.eq.s32.totalorder %s36, 1
      %p122 = por %p120, %p121
      %p124 = scmp.ne.s32.totalorder %s109, %s123
      %p125 = scmp.eq.s32.totalorder %s36, 0
      %p126 = por %p124, %p125
      %s127 = ssub.s32 %s30, %s37
      %p128 = scmp.eq.s32.totalorder %s127, 0
      %s130 = sadd.s32 %s129, 1
      %s131 = scalar_select %p128, %s129, %s130
      %p134 = pneg %p128
      %p135 = scmp.eq.s32.totalorder %s30, 1
      %p136 = por %p134, %p135
      %p137 = scmp.ne.s32.totalorder %s129, %s132
      %p138 = scmp.eq.s32.totalorder %s30, 0
      %p139 = por %p137, %p138
      %p140 = scmp.ne.s32.totalorder %s129, %s132
      %p141 = scmp.eq.s32.totalorder %s35, 1
      %p142 = por %p140, %p141
      %p143 = scmp.ne.s32.totalorder %s132, %s133
      %p144 = scmp.eq.s32.totalorder %s35, 0
      %p145 = por %p143, %p144
      %p146 = scmp.ne.s32.totalorder %s132, %s133
      %p147 = scmp.eq.s32.totalorder %s36, 1
      %p148 = por %p146, %p147
      %p150 = scmp.ne.s32.totalorder %s133, %s149
      %p151 = scmp.eq.s32.totalorder %s36, 0
      %p152 = por %p150, %p151
      %s153 = ssub.s32 %s30, %s37
      %p154 = scmp.eq.s32.totalorder %s153, 0
      %s156 = sadd.s32 %s155, 1
      %s157 = scalar_select %p154, %s155, %s156
      %p160 = pneg %p154
      %p161 = scmp.eq.s32.totalorder %s30, 1
      %p162 = por %p160, %p161
      %p163 = scmp.ne.s32.totalorder %s155, %s158
      %p164 = scmp.eq.s32.totalorder %s30, 0
      %p165 = por %p163, %p164
      %p166 = scmp.ne.s32.totalorder %s155, %s158
      %p167 = scmp.eq.s32.totalorder %s35, 1
      %p168 = por %p166, %p167
      %p169 = scmp.ne.s32.totalorder %s158, %s159
      %p170 = scmp.eq.s32.totalorder %s35, 0
      %p171 = por %p169, %p170
      %p172 = scmp.ne.s32.totalorder %s158, %s159
      %p173 = scmp.eq.s32.totalorder %s36, 1
      %p174 = por %p172, %p173
      %p176 = scmp.ne.s32.totalorder %s159, %s175
      %p177 = scmp.eq.s32.totalorder %s36, 0
      %p178 = por %p176, %p177
      %s179 = ssub.s32 %s30, %s37
      %p180 = scmp.eq.s32.totalorder %s179, 0
      %s182 = sadd.s32 %s181, 1
      %s183 = scalar_select %p180, %s181, %s182
      %p186 = pneg %p180
      %p187 = scmp.eq.s32.totalorder %s30, 1
      %p188 = por %p186, %p187
      %p189 = scmp.ne.s32.totalorder %s181, %s184
      %p190 = scmp.eq.s32.totalorder %s30, 0
      %p191 = por %p189, %p190
      %p192 = scmp.ne.s32.totalorder %s181, %s184
      %p193 = scmp.eq.s32.totalorder %s35, 1
      %p194 = por %p192, %p193
      %p195 = scmp.ne.s32.totalorder %s184, %s185
      %p196 = scmp.eq.s32.totalorder %s35, 0
      %p197 = por %p195, %p196
      %p198 = scmp.ne.s32.totalorder %s184, %s185
      %p199 = scmp.eq.s32.totalorder %s36, 1
      %p200 = por %p198, %p199
      %p202 = scmp.ne.s32.totalorder %s185, %s201
      %p203 = scmp.eq.s32.totalorder %s36, 0
      %p204 = por %p202, %p203
      %s206 = sadd.s32 %s205, 1
      %p209 = scmp.eq.s32.totalorder %s30, 1
      %p210 = scmp.ne.s32.totalorder %s205, %s207
      %p211 = scmp.eq.s32.totalorder %s30, 0
      %p212 = por %p210, %p211
      %p213 = scmp.ne.s32.totalorder %s205, %s207
      %p214 = scmp.eq.s32.totalorder %s35, 1
      %p215 = por %p213, %p214
      %p216 = scmp.ne.s32.totalorder %s207, %s208
      %p217 = scmp.eq.s32.totalorder %s35, 0
      %p218 = por %p216, %p217
      %p219 = scmp.ne.s32.totalorder %s207, %s208
      %p220 = scmp.eq.s32.totalorder %s36, 1
      %p221 = por %p219, %p220
      %p223 = scmp.ne.s32.totalorder %s208, %s222
      %p224 = scmp.eq.s32.totalorder %s36, 0
      %p225 = por %p223, %p224
      %s227 = sadd.s32 %s226, 1
      %p230 = scmp.eq.s32.totalorder %s30, 1
      %p231 = scmp.ne.s32.totalorder %s226, %s228
      %p232 = scmp.eq.s32.totalorder %s30, 0
      %p233 = por %p231, %p232
      %p234 = scmp.ne.s32.totalorder %s226, %s228
      %p235 = scmp.eq.s32.totalorder %s35, 1
      %p236 = por %p234, %p235
      %p237 = scmp.ne.s32.totalorder %s228, %s229
      %p238 = scmp.eq.s32.totalorder %s35, 0
      %p239 = por %p237, %p238
      %p240 = scmp.ne.s32.totalorder %s228, %s229
      %p241 = scmp.eq.s32.totalorder %s36, 1
      %p242 = por %p240, %p241
      %p244 = scmp.ne.s32.totalorder %s229, %s243
      %p245 = scmp.eq.s32.totalorder %s36, 0
      %p246 = por %p244, %p245
      %s248 = sadd.s32 %s247, 1
      %p251 = scmp.eq.s32.totalorder %s30, 1
      %p252 = scmp.ne.s32.totalorder %s247, %s249
      %p253 = scmp.eq.s32.totalorder %s30, 0
      %p254 = por %p252, %p253
      %p255 = scmp.ne.s32.totalorder %s247, %s249
      %p256 = scmp.eq.s32.totalorder %s35, 1
      %p257 = por %p255, %p256
      %p258 = scmp.ne.s32.totalorder %s249, %s250
      %p259 = scmp.eq.s32.totalorder %s35, 0
      %p260 = por %p258, %p259
      %p261 = scmp.ne.s32.totalorder %s249, %s250
      %p262 = scmp.eq.s32.totalorder %s36, 1
      %p263 = por %p261, %p262
      %p265 = scmp.ne.s32.totalorder %s250, %s264
      %p266 = scmp.eq.s32.totalorder %s36, 0
      %p267 = por %p265, %p266
      %s269 = sadd.s32 %s268, 1
      %p272 = scmp.eq.s32.totalorder %s30, 1
      %p273 = scmp.ne.s32.totalorder %s268, %s270
      %p274 = scmp.eq.s32.totalorder %s30, 0
      %p275 = por %p273, %p274
      %p276 = scmp.ne.s32.totalorder %s268, %s270
      %p277 = scmp.eq.s32.totalorder %s35, 1
      %p278 = por %p276, %p277
      %p279 = scmp.ne.s32.totalorder %s270, %s271
      %p280 = scmp.eq.s32.totalorder %s35, 0
      %p281 = por %p279, %p280
      %p282 = scmp.ne.s32.totalorder %s270, %s271
      %p283 = scmp.eq.s32.totalorder %s36, 1
      %p284 = por %p282, %p283
      %p286 = scmp.ne.s32.totalorder %s271, %s285
      %p287 = scmp.eq.s32.totalorder %s36, 0
      %p288 = por %p286, %p287
      %s289 = ssub.s32 %s30, %s37
      %p290 = scmp.eq.s32.totalorder %s289, 0
      %s292 = sadd.s32 %s291, 1
      %s293 = scalar_select %p290, %s291, %s292
      %p296 = pneg %p290
      %p297 = scmp.eq.s32.totalorder %s30, 1
      %p298 = por %p296, %p297
      %p299 = scmp.ne.s32.totalorder %s291, %s294
      %p300 = scmp.eq.s32.totalorder %s30, 0
      %p301 = por %p299, %p300
      %p302 = scmp.ne.s32.totalorder %s291, %s294
      %p303 = scmp.eq.s32.totalorder %s35, 1
      %p304 = por %p302, %p303
      %p305 = scmp.ne.s32.totalorder %s294, %s295
      %p306 = scmp.eq.s32.totalorder %s35, 0
      %p307 = por %p305, %p306
      %p308 = scmp.ne.s32.totalorder %s294, %s295
      %p309 = scmp.eq.s32.totalorder %s36, 1
      %p310 = por %p308, %p309
      %p312 = scmp.ne.s32.totalorder %s295, %s311
      %p313 = scmp.eq.s32.totalorder %s36, 0
      %p314 = por %p312, %p313
      %s315 = ssub.s32 %s30, %s37
      %p316 = scmp.eq.s32.totalorder %s315, 0
      %s318 = sadd.s32 %s317, 1
      %s319 = scalar_select %p316, %s317, %s318
      %p322 = pneg %p316
      %p323 = scmp.eq.s32.totalorder %s30, 1
      %p324 = por %p322, %p323
      %p325 = scmp.ne.s32.totalorder %s317, %s320
      %p326 = scmp.eq.s32.totalorder %s30, 0
      %p327 = por %p325, %p326
      %p328 = scmp.ne.s32.totalorder %s317, %s320
      %p329 = scmp.eq.s32.totalorder %s35, 1
      %p330 = por %p328, %p329
      %p331 = scmp.ne.s32.totalorder %s320, %s321
      %p332 = scmp.eq.s32.totalorder %s35, 0
      %p333 = por %p331, %p332
      %p334 = scmp.ne.s32.totalorder %s320, %s321
      %p335 = scmp.eq.s32.totalorder %s36, 1
      %p336 = por %p334, %p335
      %p338 = scmp.ne.s32.totalorder %s321, %s337
      %p339 = scmp.eq.s32.totalorder %s36, 0
      %p340 = por %p338, %p339
      %p341 = scmp.le.s32.totalorder 1, %s30
      %p342 = scmp.lt.s32.totalorder %s30, 3
      %p343 = pnand %p341, %p342
      %p344 = pneg %p343
      // Predicated region
      $region9: #{layoutlmv2_attention.1} parent=5 // pred_check
        _
      $region10: #{layoutlmv2_attention.1} parent=5 // pred_check_branch
        %346 = sbr.rel (%p343) target = $region12
      $region11: #{layoutlmv2_attention.1} parent=5 // pred_region
        %s347 = ssub.s32 %s30, 1
        // Predicated region
        $region13: #{layoutlmv2_attention.1} parent=11 // pred_check
          %p348 = pneg %p77
        $region14: #{layoutlmv2_attention.1} parent=11 // pred_check_branch
          %350 = sbr.rel (%p348) target = $region16
        $region15: #{layoutlmv2_attention.1} parent=11 // pred_region
          %352 = vsyncadd [#allocation6], 0
          %s353 = sshll.u32 %s1, 4
          %s354 = int_to_ptr.hbm [resolvable:$true] %s353
          %s355 = sshll.u32 [#allocation5], 4
          %s356 = int_to_ptr.vmem [resolvable:$true] %s355
          %361 = dma.hbm_to_vmem [thread:$0]  %s354, 512, %s356, [#allocation6], 128, 128, 8
        $region16: #{layoutlmv2_attention.1} parent=11 // pred_fallthru
          _
        // Predicated region
        $region17: #{layoutlmv2_attention.1} parent=11 // pred_check
          %p362 = pneg %p98
        $region18: #{layoutlmv2_attention.1} parent=11 // pred_check_branch
          %364 = sbr.rel (%p362) target = $region20
        $region19: #{layoutlmv2_attention.1} parent=11 // pred_region
          _
        $region20: #{layoutlmv2_attention.1} parent=11 // pred_fallthru
          _
        // Predicated region
        $region21: #{layoutlmv2_attention.1} parent=11 // pred_check
          %p365 = pneg %p119
        $region22: #{layoutlmv2_attention.1} parent=11 // pred_check_branch
          %367 = sbr.rel (%p365) target = $region24
        $region23: #{layoutlmv2_attention.1} parent=11 // pred_region
          _
        $region24: #{layoutlmv2_attention.1} parent=11 // pred_fallthru
          _
        // Predicated region
        $region25: #{layoutlmv2_attention.1} parent=11 // pred_check
          %p368 = pneg %p218
        $region26: #{layoutlmv2_attention.1} parent=11 // pred_check_branch
          %370 = sbr.rel (%p368) target = $region28
        $region27: #{layoutlmv2_attention.1} parent=11 // pred_region
          %372 = vsyncadd [#allocation6], 0
          %s373 = sshll.u32 %s7, 4
          %s374 = int_to_ptr.hbm [resolvable:$true] %s373
          %s375 = sshll.u32 [#allocation10], 4
          %s376 = int_to_ptr.vmem [resolvable:$true] %s375
          %381 = dma.hbm_to_vmem [thread:$0]  %s374, 512, %s376, [#allocation6], 128, 128, 8
        $region28: #{layoutlmv2_attention.1} parent=11 // pred_fallthru
          _
        // Predicated region
        $region29: #{layoutlmv2_attention.1} parent=11 // pred_check
          %p382 = pneg %p239
        $region30: #{layoutlmv2_attention.1} parent=11 // pred_check_branch
          %384 = sbr.rel (%p382) target = $region32
        $region31: #{layoutlmv2_attention.1} parent=11 // pred_region
          _
        $region32: #{layoutlmv2_attention.1} parent=11 // pred_fallthru
          _
        // Predicated region
        $region33: #{layoutlmv2_attention.1} parent=11 // pred_check
          %p385 = pneg %p260
        $region34: #{layoutlmv2_attention.1} parent=11 // pred_check_branch
          %387 = sbr.rel (%p385) target = $region36
        $region35: #{layoutlmv2_attention.1} parent=11 // pred_region
          _
        $region36: #{layoutlmv2_attention.1} parent=11 // pred_fallthru
          _
        // Predicated region
        $region37: #{layoutlmv2_attention.1} parent=11 // pred_check
          %p388 = pneg %p281
        $region38: #{layoutlmv2_attention.1} parent=11 // pred_check_branch
          %390 = sbr.rel (%p388) target = $region40
        $region39: #{layoutlmv2_attention.1} parent=11 // pred_region
          %392 = vsyncadd [#allocation12], 0
          %s394 = sshll.u32 %s10, 4
          %s395 = int_to_ptr.hbm [resolvable:$true] %s394
          %s396 = sshll.u32 [#allocation11], 4
          %s397 = int_to_ptr.vmem [resolvable:$true] %s396
          %399 = dma.hbm_to_vmem [thread:$0]  %s395, 16, %s397, [#allocation12]
        $region40: #{layoutlmv2_attention.1} parent=11 // pred_fallthru
          _
      $region12: #{layoutlmv2_attention.1} parent=5 // pred_fallthru
        _
      %p400 = scmp.lt.s32.totalorder %s30, 2
      // Predicated region
      $region41: #{layoutlmv2_attention.1} parent=5 // pred_check
        %p401 = pneg %p400
      $region42: #{layoutlmv2_attention.1} parent=5 // pred_check_branch
        %403 = sbr.rel (%p401) target = $region44
      $region43: #{layoutlmv2_attention.1} parent=5 // pred_region
        // Predicated region
        $region45: #{layoutlmv2_attention.1} parent=43 // pred_check
          %p404 = pneg %p50
        $region46: #{layoutlmv2_attention.1} parent=43 // pred_check_branch
          %406 = sbr.rel (%p404) target = $region48
        $region47: #{layoutlmv2_attention.1} parent=43 // pred_region
          %s407 = sand.u32 %s30, 1
          %s408 = scalar_lea.sflag [#allocation3], %s407
          %s409 = sand.u32 %s40, 1
          %s410 = smul.addr %s409, 8
          %s411 = scalar_lea.vmem [#allocation2], %s410
          %413 = vsyncadd %s408, 0
          %s414 = smul.addr %s30, 8
          %s415 = scalar_lea.hbm %s0, %s414
          %s417 = sshll.u32 %s415, 4
          %s418 = int_to_ptr.hbm [resolvable:$true] %s417
          %s419 = sshll.u32 %s411, 4
          %s420 = int_to_ptr.vmem [resolvable:$true] %s419
          %422 = dma.hbm_to_vmem [thread:$0]  %s418, 128, %s420, %s408
        $region48: #{layoutlmv2_attention.1} parent=43 // pred_fallthru
          _
        // Predicated region
        $region49: #{layoutlmv2_attention.1} parent=43 // pred_check
          %p423 = pneg %p139
        $region50: #{layoutlmv2_attention.1} parent=43 // pred_check_branch
          %425 = sbr.rel (%p423) target = $region52
        $region51: #{layoutlmv2_attention.1} parent=43 // pred_region
          %s426 = sand.u32 %s30, 1
          %s427 = scalar_lea.sflag [#allocation3], %s426
          %s428 = sand.u32 %s129, 1
          %s429 = scalar_lea.vmem [#allocation7], %s428
          %431 = vsyncadd %s427, 0
          %s432 = scalar_lea.hbm %s4, %s30
          %s434 = sshll.u32 %s432, 4
          %s435 = int_to_ptr.hbm [resolvable:$true] %s434
          %s436 = sshll.u32 %s429, 4
          %s437 = int_to_ptr.vmem [resolvable:$true] %s436
          %439 = dma.hbm_to_vmem [thread:$0]  %s435, 16, %s437, %s427
        $region52: #{layoutlmv2_attention.1} parent=43 // pred_fallthru
          _
        // Predicated region
        $region53: #{layoutlmv2_attention.1} parent=43 // pred_check
          %p440 = pneg %p165
        $region54: #{layoutlmv2_attention.1} parent=43 // pred_check_branch
          %442 = sbr.rel (%p440) target = $region56
        $region55: #{layoutlmv2_attention.1} parent=43 // pred_region
          %s443 = sand.u32 %s30, 1
          %s444 = scalar_lea.sflag [#allocation3], %s443
          %s445 = sand.u32 %s155, 1
          %s446 = smul.addr %s445, 32
          %s447 = scalar_lea.vmem [#allocation8], %s446
          %449 = vsyncadd %s444, 0
          %s450 = smul.addr %s30, 4
          %s451 = smul.addr %s450, 8
          %s452 = scalar_lea.hbm %s5, %s451
          %s453 = sshll.u32 %s452, 4
          %s454 = int_to_ptr.hbm [resolvable:$true] %s453
          %s455 = sshll.u32 %s447, 4
          %s456 = int_to_ptr.vmem [resolvable:$true] %s455
          %461 = dma.hbm_to_vmem [thread:$0]  %s454, 512, %s456, %s444, 128, 128, 8
        $region56: #{layoutlmv2_attention.1} parent=43 // pred_fallthru
          _
        // Predicated region
        $region57: #{layoutlmv2_attention.1} parent=43 // pred_check
          %p462 = pneg %p191
        $region58: #{layoutlmv2_attention.1} parent=43 // pred_check_branch
          %464 = sbr.rel (%p462) target = $region60
        $region59: #{layoutlmv2_attention.1} parent=43 // pred_region
          %s465 = sand.u32 %s30, 1
          %s466 = scalar_lea.sflag [#allocation3], %s465
          %s467 = sand.u32 %s181, 1
          %s468 = smul.addr %s467, 32
          %s469 = scalar_lea.vmem [#allocation9], %s468
          %471 = vsyncadd %s466, 0
          %s472 = smul.addr %s30, 4
          %s473 = smul.addr %s472, 8
          %s474 = scalar_lea.hbm %s6, %s473
          %s475 = sshll.u32 %s474, 4
          %s476 = int_to_ptr.hbm [resolvable:$true] %s475
          %s477 = sshll.u32 %s469, 4
          %s478 = int_to_ptr.vmem [resolvable:$true] %s477
          %483 = dma.hbm_to_vmem [thread:$0]  %s476, 512, %s478, %s466, 128, 128, 8
        $region60: #{layoutlmv2_attention.1} parent=43 // pred_fallthru
          _
      $region44: #{layoutlmv2_attention.1} parent=5 // pred_fallthru
        _
      %p484 = scmp.le.s32.totalorder 1, %s30
      %p485 = scmp.lt.s32.totalorder %s30, 3
      %p486 = pnand %p484, %p485
      %p487 = pneg %p486
      // Predicated region
      $region61: #{layoutlmv2_attention.1} parent=5 // pred_check
        _
      $region62: #{layoutlmv2_attention.1} parent=5 // pred_check_branch
        %489 = sbr.rel (%p486) target = $region64
      $region63: #{layoutlmv2_attention.1} parent=5 // pred_region
        %s490 = ssub.s32 %s30, 1
        %s491 = sand.u32 %s35, 1
        %s492 = scalar_lea.sflag [#allocation3], %s491
        %s493 = sand.u32 %s43, 1
        %s494 = smul.addr %s493, 8
        %s495 = scalar_lea.vmem [#allocation2], %s494
        // Predicated region
        $region65: #{layoutlmv2_attention.1} parent=63 // pred_check
          %p496 = pneg %p56
        $region66: #{layoutlmv2_attention.1} parent=63 // pred_check_branch
          %498 = sbr.rel (%p496) target = $region68
        $region67: #{layoutlmv2_attention.1} parent=63 // pred_region
          %500 = dma.done %s492, 128
        $region68: #{layoutlmv2_attention.1} parent=63 // pred_fallthru
          _
        // Predicated region
        $region69: #{layoutlmv2_attention.1} parent=63 // pred_check
          %p501 = pneg %p77
        $region70: #{layoutlmv2_attention.1} parent=63 // pred_check_branch
          %503 = sbr.rel (%p501) target = $region72
        $region71: #{layoutlmv2_attention.1} parent=63 // pred_region
          %505 = dma.done [#allocation6], 512
        $region72: #{layoutlmv2_attention.1} parent=63 // pred_fallthru
          _
        %s506 = sand.u32 %s35, 1
        %s507 = scalar_lea.sflag [#allocation3], %s506
        %s508 = sand.u32 %s132, 1
        %s509 = scalar_lea.vmem [#allocation7], %s508
        // Predicated region
        $region73: #{layoutlmv2_attention.1} parent=63 // pred_check
          %p510 = pneg %p145
        $region74: #{layoutlmv2_attention.1} parent=63 // pred_check_branch
          %512 = sbr.rel (%p510) target = $region76
        $region75: #{layoutlmv2_attention.1} parent=63 // pred_region
          %514 = dma.done %s507, 16
        $region76: #{layoutlmv2_attention.1} parent=63 // pred_fallthru
          _
        %s515 = sand.u32 %s35, 1
        %s516 = scalar_lea.sflag [#allocation3], %s515
        %s517 = sand.u32 %s158, 1
        %s518 = smul.addr %s517, 32
        %s519 = scalar_lea.vmem [#allocation8], %s518
        // Predicated region
        $region77: #{layoutlmv2_attention.1} parent=63 // pred_check
          %p520 = pneg %p171
        $region78: #{layoutlmv2_attention.1} parent=63 // pred_check_branch
          %522 = sbr.rel (%p520) target = $region80
        $region79: #{layoutlmv2_attention.1} parent=63 // pred_region
          %524 = dma.done %s516, 512
        $region80: #{layoutlmv2_attention.1} parent=63 // pred_fallthru
          _
        %s525 = sand.u32 %s35, 1
        %s526 = scalar_lea.sflag [#allocation3], %s525
        %s527 = sand.u32 %s184, 1
        %s528 = smul.addr %s527, 32
        %s529 = scalar_lea.vmem [#allocation9], %s528
        // Predicated region
        $region81: #{layoutlmv2_attention.1} parent=63 // pred_check
          %p530 = pneg %p197
        $region82: #{layoutlmv2_attention.1} parent=63 // pred_check_branch
          %532 = sbr.rel (%p530) target = $region84
        $region83: #{layoutlmv2_attention.1} parent=63 // pred_region
          %534 = dma.done %s526, 512
        $region84: #{layoutlmv2_attention.1} parent=63 // pred_fallthru
          _
        // Predicated region
        $region85: #{layoutlmv2_attention.1} parent=63 // pred_check
          %p535 = pneg %p218
        $region86: #{layoutlmv2_attention.1} parent=63 // pred_check_branch
          %537 = sbr.rel (%p535) target = $region88
        $region87: #{layoutlmv2_attention.1} parent=63 // pred_region
          %539 = dma.done [#allocation6], 512
        $region88: #{layoutlmv2_attention.1} parent=63 // pred_fallthru
          _
        // Predicated region
        $region89: #{layoutlmv2_attention.1} parent=63 // pred_check
          %p540 = pneg %p281
        $region90: #{layoutlmv2_attention.1} parent=63 // pred_check_branch
          %542 = sbr.rel (%p540) target = $region92
        $region91: #{layoutlmv2_attention.1} parent=63 // pred_region
          %544 = dma.done [#allocation12], 16
        $region92: #{layoutlmv2_attention.1} parent=63 // pred_fallthru
          _
        %s545 = sand.u32 %s35, 1
        %s546 = scalar_lea.sflag [#allocation3], %s545
        %s547 = sand.u32 %s43, 1
        %s548 = smul.addr %s547, 8
        %s549 = scalar_lea.vmem [#allocation2], %s548
        %p550 = pneg %p56
        %p551 = pneg %p53
        %p552 = pneg %p77
        %p553 = pneg %p74
        %p554 = pneg %p98
        %p555 = pneg %p95
        %p556 = pneg %p119
        %p557 = pneg %p116
        %s558 = sand.u32 %s35, 1
        %s559 = scalar_lea.sflag [#allocation3], %s558
        %s560 = sand.u32 %s132, 1
        %s561 = scalar_lea.vmem [#allocation7], %s560
        %p562 = pneg %p145
        %p563 = pneg %p142
        %s564 = sand.u32 %s35, 1
        %s565 = scalar_lea.sflag [#allocation3], %s564
        %s566 = sand.u32 %s158, 1
        %s567 = smul.addr %s566, 32
        %s568 = scalar_lea.vmem [#allocation8], %s567
        %p569 = pneg %p171
        %p570 = pneg %p168
        %s571 = sand.u32 %s35, 1
        %s572 = scalar_lea.sflag [#allocation3], %s571
        %s573 = sand.u32 %s184, 1
        %s574 = smul.addr %s573, 32
        %s575 = scalar_lea.vmem [#allocation9], %s574
        %p576 = pneg %p197
        %p577 = pneg %p194
        %p578 = pneg %p218
        %p579 = pneg %p215
        %p580 = pneg %p239
        %p581 = pneg %p236
        %p582 = pneg %p260
        %p583 = pneg %p257
        %p584 = pneg %p281
        %p585 = pneg %p278
        %p586 = pneg %p307
        %p587 = pneg %p304
        %s588 = sand.u32 %s294, 1
        %s589 = scalar_lea.sflag [#allocation4], %s588
        %s590 = sand.u32 %s294, 1
        %s591 = smul.addr %s590, 8
        %s592 = scalar_lea.vmem [#allocation13], %s591
        %p593 = pneg %p333
        %p594 = pneg %p330
        %s595 = sand.u32 %s320, 1
        %s596 = scalar_lea.sflag [#allocation15], %s595
        %s597 = sand.u32 %s320, 1
        %s598 = smul.addr %s597, 32
        %s599 = scalar_lea.vmem [#allocation14], %s598
        %v600 = vld [vmem:[%s495] sm:$0xff]
        %v601 = vld [vmem:[#allocation5] sm:$0xff]
        %v602 = vld [vmem:[#allocation5 + $0x8] sm:$0xff]
        %v603 = vld [vmem:[#allocation5 + $0x10] sm:$0xff]
        %v604 = vld [vmem:[#allocation5 + $0x18] sm:$0xff]
        %vm605 = vcmask 261120
        %v607 = vsel %vm605, %v600, 0
        %609 = vmatpush.msra.mxu0 0.0
        %610 = vmatpush.msra.mxu0 0.0
        %611 = vmatpush.msra.mxu0 0.0
        %612 = vmatpush.msra.mxu0 0.0
        %613 = vmatpush.msra.mxu0 0.0
        %614 = vmatpush.msra.mxu0 0.0
        %615 = vmatpush.msra.mxu0 0.0
        %616 = vmatpush.msra.mxu0 0.0
        %617 = vmatpush.msra.mxu0 0.0
        %618 = vmatpush.msra.mxu0 0.0
        %619 = vmatpush.msra.mxu0 0.0
        %620 = vmatpush.msra.mxu0 0.0
        %621 = vmatpush.msra.mxu0 %v604
        %622 = vmatpush.msra.mxu0 %v603
        %623 = vmatpush.msra.mxu0 %v602
        %624 = vmatpush.msra.mxu0 %v601
        %625 = vmatmul.f32.gmra.mxu0 %v607
        %v626 = vpop.f32.mrf.mxu0
        %v627 = vadd.f32 0.0, %v626
        %628 = vdwg.mxu0
        %v629 = vld [vmem:[%s2] sm:$0x1]
        %v631 = vperm.slane %v629, 0
        %v633 = vadd.f32 %v627, %v631
        %v634 = vmul.f32 %v633, 0.35355338
        %v635 = vld [vmem:[%s3] sm:$0x1]
        %v637 = vperm.slane %v635, 0
        %638 = vrot.lane.b32.xlu0 %v637, 64
        %v639 = vpop.permute.xlu0 %638
        %v641 = vadd.f32 %v627, %v639
        %643 = vrot.lane.b32.xlu0 %v634, 120
        %v644 = vpop.permute.xlu0 %643
        %645 = vrot.lane.b32.xlu0 %v634, 112
        %v646 = vpop.permute.xlu0 %645
        %647 = vrot.lane.b32.xlu0 %v634, 104
        %v648 = vpop.permute.xlu0 %647
        %650 = vrot.lane.b32.xlu0 %v627, 120
        %v651 = vpop.permute.xlu0 %650
        %652 = vrot.lane.b32.xlu0 %v627, 112
        %v653 = vpop.permute.xlu0 %652
        %654 = vrot.lane.b32.xlu0 %v627, 104
        %v655 = vpop.permute.xlu0 %654
        %657 = vrot.lane.b32.xlu0 %v641, 120
        %v658 = vpop.permute.xlu0 %657
        %659 = vrot.lane.b32.xlu0 %v641, 112
        %v660 = vpop.permute.xlu0 %659
        %661 = vrot.lane.b32.xlu0 %v641, 104
        %v662 = vpop.permute.xlu0 %661
        %v663 = vld [vmem:[%s519] sm:$0xff]
        %v664 = vld [vmem:[%s519 + $0x8] sm:$0xff]
        %v665 = vld [vmem:[%s519 + $0x10] sm:$0xff]
        %v666 = vld [vmem:[%s519 + $0x18] sm:$0xff]
        %667 = vrot.lane.b32.xlu0 %v627, 96
        %v668 = vpop.permute.xlu0 %667
        %vm669 = vcmask 64512
        %v670 = vsel %vm669, %v634, 0
        %v672 = vsel %vm669, %v668, 0
        %674 = vmatpush.xpose.msra.mxu0 0.0
        %675 = vmatpush.xpose.msra.mxu0 0.0
        %676 = vmatpush.xpose.msra.mxu0 0.0
        %677 = vmatpush.xpose.msra.mxu0 0.0
        %678 = vmatpush.xpose.msra.mxu0 0.0
        %679 = vmatpush.xpose.msra.mxu0 0.0
        %680 = vmatpush.xpose.msra.mxu0 0.0
        %681 = vmatpush.xpose.msra.mxu0 0.0
        %682 = vmatpush.xpose.msra.mxu0 0.0
        %683 = vmatpush.xpose.msra.mxu0 0.0
        %684 = vmatpush.xpose.msra.mxu0 0.0
        %685 = vmatpush.xpose.msra.mxu0 0.0
        %686 = vmatpush.xpose.msra.mxu0 0.0
        %687 = vmatpush.xpose.msra.mxu0 0.0
        %688 = vmatpush.xpose.msra.mxu0 0.0
        %689 = vmatpush.xpose.msra.mxu0 %v672
        %690 = vmatmul.f32.gmra.mxu0 %v670
        %v691 = vpop.f32.mrf.mxu0
        %v692 = vadd.f32 %v663, %v691
        %693 = vdwg.mxu0
        %694 = vrot.lane.b32.xlu0 %v651, 96
        %v695 = vpop.permute.xlu0 %694
        %v696 = vsel %vm669, %v644, 0
        %v698 = vsel %vm669, %v695, 0
        %700 = vmatpush.xpose.msra.mxu0 0.0
        %701 = vmatpush.xpose.msra.mxu0 0.0
        %702 = vmatpush.xpose.msra.mxu0 0.0
        %703 = vmatpush.xpose.msra.mxu0 0.0
        %704 = vmatpush.xpose.msra.mxu0 0.0
        %705 = vmatpush.xpose.msra.mxu0 0.0
        %706 = vmatpush.xpose.msra.mxu0 0.0
        %707 = vmatpush.xpose.msra.mxu0 0.0
        %708 = vmatpush.xpose.msra.mxu0 0.0
        %709 = vmatpush.xpose.msra.mxu0 0.0
        %710 = vmatpush.xpose.msra.mxu0 0.0
        %711 = vmatpush.xpose.msra.mxu0 0.0
        %712 = vmatpush.xpose.msra.mxu0 0.0
        %713 = vmatpush.xpose.msra.mxu0 0.0
        %714 = vmatpush.xpose.msra.mxu0 0.0
        %715 = vmatpush.xpose.msra.mxu0 %v698
        %716 = vmatmul.f32.gmra.mxu0 %v696
        %v717 = vpop.f32.mrf.mxu0
        %v718 = vadd.f32 %v664, %v717
        %719 = vdwg.mxu0
        %720 = vrot.lane.b32.xlu0 %v653, 96
        %v721 = vpop.permute.xlu0 %720
        %v722 = vsel %vm669, %v646, 0
        %v724 = vsel %vm669, %v721, 0
        %726 = vmatpush.xpose.msra.mxu0 0.0
        %727 = vmatpush.xpose.msra.mxu0 0.0
        %728 = vmatpush.xpose.msra.mxu0 0.0
        %729 = vmatpush.xpose.msra.mxu0 0.0
        %730 = vmatpush.xpose.msra.mxu0 0.0
        %731 = vmatpush.xpose.msra.mxu0 0.0
        %732 = vmatpush.xpose.msra.mxu0 0.0
        %733 = vmatpush.xpose.msra.mxu0 0.0
        %734 = vmatpush.xpose.msra.mxu0 0.0
        %735 = vmatpush.xpose.msra.mxu0 0.0
        %736 = vmatpush.xpose.msra.mxu0 0.0
        %737 = vmatpush.xpose.msra.mxu0 0.0
        %738 = vmatpush.xpose.msra.mxu0 0.0
        %739 = vmatpush.xpose.msra.mxu0 0.0
        %740 = vmatpush.xpose.msra.mxu0 0.0
        %741 = vmatpush.xpose.msra.mxu0 %v724
        %742 = vmatmul.f32.gmra.mxu0 %v722
        %v743 = vpop.f32.mrf.mxu0
        %v744 = vadd.f32 %v665, %v743
        %745 = vdwg.mxu0
        %746 = vrot.lane.b32.xlu0 %v655, 96
        %v747 = vpop.permute.xlu0 %746
        %v748 = vsel %vm669, %v648, 0
        %v750 = vsel %vm669, %v747, 0
        %752 = vmatpush.xpose.msra.mxu0 0.0
        %753 = vmatpush.xpose.msra.mxu0 0.0
        %754 = vmatpush.xpose.msra.mxu0 0.0
        %755 = vmatpush.xpose.msra.mxu0 0.0
        %756 = vmatpush.xpose.msra.mxu0 0.0
        %757 = vmatpush.xpose.msra.mxu0 0.0
        %758 = vmatpush.xpose.msra.mxu0 0.0
        %759 = vmatpush.xpose.msra.mxu0 0.0
        %760 = vmatpush.xpose.msra.mxu0 0.0
        %761 = vmatpush.xpose.msra.mxu0 0.0
        %762 = vmatpush.xpose.msra.mxu0 0.0
        %763 = vmatpush.xpose.msra.mxu0 0.0
        %764 = vmatpush.xpose.msra.mxu0 0.0
        %765 = vmatpush.xpose.msra.mxu0 0.0
        %766 = vmatpush.xpose.msra.mxu0 0.0
        %767 = vmatpush.xpose.msra.mxu0 %v750
        %768 = vmatmul.f32.gmra.mxu0 %v748
        %v769 = vpop.f32.mrf.mxu0
        %v770 = vadd.f32 %v666, %v769
        %771 = vdwg.mxu0
        %v772 = vld [vmem:[%s529] sm:$0xff]
        %v773 = vld [vmem:[%s529 + $0x8] sm:$0xff]
        %v774 = vld [vmem:[%s529 + $0x10] sm:$0xff]
        %v775 = vld [vmem:[%s529 + $0x18] sm:$0xff]
        %v776 = vadd.f32 %v692, %v772
        %v777 = vadd.f32 %v718, %v773
        %v778 = vadd.f32 %v744, %v774
        %v779 = vadd.f32 %v770, %v775
        %v780 = vld [vmem:[%s509] sm:$0x1]
        %vm781 = vcmp.ne.f32.partialorder %v780, 0.0
        %v782 = vsel %vm781, 1, 0
        %v783 = vperm.slane %v782, 0
        %vm784 = vcmp.eq.s32.totalorder %v783, 1
        %v785 = vsel %vm784, -inf, %v776
        %v786 = vsel %vm784, -inf, %v777
        %v787 = vsel %vm784, -inf, %v778
        %v788 = vsel %vm784, -inf, %v779
        %v789 = vsel %vm669, %v785, -inf
        %790 = vmax.xlane.f32.xlu0 %v789
        %v791 = vpop.xlane.xlu0 %790
        %v792 = vsel %vm669, %v786, -inf
        %793 = vmax.xlane.f32.xlu0 %v792
        %v794 = vpop.xlane.xlu0 %793
        %v795 = vsel %vm669, %v787, -inf
        %796 = vmax.xlane.f32.xlu0 %v795
        %v797 = vpop.xlane.xlu0 %796
        %v798 = vsel %vm669, %v788, -inf
        %799 = vmax.xlane.f32.xlu0 %v798
        %v800 = vpop.xlane.xlu0 %799
        %v801 = vsub.f32 %v785, %v791
        %v802 = vsub.f32 %v786, %v794
        %v803 = vsub.f32 %v787, %v797
        %v804 = vsub.f32 %v788, %v800
        %v805 = vmul.f32 %v801, 1.442695
        %v806 = vpow.pop %v805
        %v807 = vmul.f32 %v802, 1.442695
        %v808 = vpow.pop %v807
        %v809 = vmul.f32 %v803, 1.442695
        %v810 = vpow.pop %v809
        %v811 = vmul.f32 %v804, 1.442695
        %v812 = vpow.pop %v811
        %v813 = vsel %vm669, %v806, 0.0
        %814 = vadd.xlane.f32.xlu0 %v813
        %v815 = vpop.xlane.xlu0 %814
        %v816 = vsel %vm669, %v808, 0.0
        %817 = vadd.xlane.f32.xlu0 %v816
        %v818 = vpop.xlane.xlu0 %817
        %v819 = vsel %vm669, %v810, 0.0
        %820 = vadd.xlane.f32.xlu0 %v819
        %v821 = vpop.xlane.xlu0 %820
        %v822 = vsel %vm669, %v812, 0.0
        %823 = vadd.xlane.f32.xlu0 %v822
        %v824 = vpop.xlane.xlu0 %823
        %v825 = vrcp.pop %v815
        %v826 = vrcp.pop %v818
        %v827 = vrcp.pop %v821
        %v828 = vrcp.pop %v824
        %v829 = vmul.f32 %v815, %v825
        %v830 = vmul.f32 %v818, %v826
        %v831 = vmul.f32 %v821, %v827
        %v832 = vmul.f32 %v824, %v828
        %v833 = vsub.f32 2.0, %v829
        %v834 = vsub.f32 2.0, %v830
        %v835 = vsub.f32 2.0, %v831
        %v836 = vsub.f32 2.0, %v832
        %v837 = vmul.f32 %v825, %v833
        %v838 = vmul.f32 %v826, %v834
        %v839 = vmul.f32 %v827, %v835
        %v840 = vmul.f32 %v828, %v836
        %v841 = vmul.f32 %v806, %v837
        %v842 = vmul.f32 %v808, %v838
        %v843 = vmul.f32 %v810, %v839
        %v844 = vmul.f32 %v812, %v840
        %845 = vst.msk [vmem:[%s599] sm:$0xff] %vm669, %v841
        %846 = vst.msk [vmem:[%s599 + $0x8] sm:$0xff] %vm669, %v842
        %847 = vst.msk [vmem:[%s599 + $0x10] sm:$0xff] %vm669, %v843
        %848 = vst.msk [vmem:[%s599 + $0x18] sm:$0xff] %vm669, %v844
        %849 = vrot.lane.b32.xlu0 %v641, 64
        %v850 = vpop.permute.xlu0 %849
        %v853 = vsel %vm669, %v841, 0
        %855 = vmatpush.msra.mxu0 0.0
        %856 = vmatpush.msra.mxu0 0.0
        %857 = vmatpush.msra.mxu0 0.0
        %858 = vmatpush.msra.mxu0 0.0
        %859 = vmatpush.msra.mxu0 0.0
        %860 = vmatpush.msra.mxu0 0.0
        %861 = vmatpush.msra.mxu0 0.0
        %862 = vmatpush.msra.mxu0 0.0
        %863 = vmatpush.msra.mxu0 0.0
        %864 = vmatpush.msra.mxu0 0.0
        %865 = vmatpush.msra.mxu0 0.0
        %866 = vmatpush.msra.mxu0 0.0
        %867 = vmatpush.msra.mxu0 0.0
        %868 = vmatpush.msra.mxu0 0.0
        %869 = vmatpush.msra.mxu0 0.0
        %870 = vmatpush.msra.mxu0 %v850
        %871 = vmatmul.f32.gmra.mxu0 %v853
        %v872 = vpop.f32.mrf.mxu0
        %v873 = vadd.f32 0.0, %v872
        %874 = vdwg.mxu0
        %875 = vrot.lane.b32.xlu0 %v658, 64
        %v876 = vpop.permute.xlu0 %875
        %v879 = vsel %vm669, %v842, 0
        %881 = vmatpush.msra.mxu0 0.0
        %882 = vmatpush.msra.mxu0 0.0
        %883 = vmatpush.msra.mxu0 0.0
        %884 = vmatpush.msra.mxu0 0.0
        %885 = vmatpush.msra.mxu0 0.0
        %886 = vmatpush.msra.mxu0 0.0
        %887 = vmatpush.msra.mxu0 0.0
        %888 = vmatpush.msra.mxu0 0.0
        %889 = vmatpush.msra.mxu0 0.0
        %890 = vmatpush.msra.mxu0 0.0
        %891 = vmatpush.msra.mxu0 0.0
        %892 = vmatpush.msra.mxu0 0.0
        %893 = vmatpush.msra.mxu0 0.0
        %894 = vmatpush.msra.mxu0 0.0
        %895 = vmatpush.msra.mxu0 0.0
        %896 = vmatpush.msra.mxu0 %v876
        %897 = vmatmul.f32.gmra.mxu0 %v879
        %v898 = vpop.f32.mrf.mxu0
        %v899 = vadd.f32 0.0, %v898
        %900 = vdwg.mxu0
        %901 = vrot.lane.b32.xlu0 %v660, 64
        %v902 = vpop.permute.xlu0 %901
        %v905 = vsel %vm669, %v843, 0
        %907 = vmatpush.msra.mxu0 0.0
        %908 = vmatpush.msra.mxu0 0.0
        %909 = vmatpush.msra.mxu0 0.0
        %910 = vmatpush.msra.mxu0 0.0
        %911 = vmatpush.msra.mxu0 0.0
        %912 = vmatpush.msra.mxu0 0.0
        %913 = vmatpush.msra.mxu0 0.0
        %914 = vmatpush.msra.mxu0 0.0
        %915 = vmatpush.msra.mxu0 0.0
        %916 = vmatpush.msra.mxu0 0.0
        %917 = vmatpush.msra.mxu0 0.0
        %918 = vmatpush.msra.mxu0 0.0
        %919 = vmatpush.msra.mxu0 0.0
        %920 = vmatpush.msra.mxu0 0.0
        %921 = vmatpush.msra.mxu0 0.0
        %922 = vmatpush.msra.mxu0 %v902
        %923 = vmatmul.f32.gmra.mxu0 %v905
        %v924 = vpop.f32.mrf.mxu0
        %v925 = vadd.f32 0.0, %v924
        %926 = vdwg.mxu0
        %927 = vrot.lane.b32.xlu0 %v662, 64
        %v928 = vpop.permute.xlu0 %927
        %v931 = vsel %vm669, %v844, 0
        %933 = vmatpush.msra.mxu0 0.0
        %934 = vmatpush.msra.mxu0 0.0
        %935 = vmatpush.msra.mxu0 0.0
        %936 = vmatpush.msra.mxu0 0.0
        %937 = vmatpush.msra.mxu0 0.0
        %938 = vmatpush.msra.mxu0 0.0
        %939 = vmatpush.msra.mxu0 0.0
        %940 = vmatpush.msra.mxu0 0.0
        %941 = vmatpush.msra.mxu0 0.0
        %942 = vmatpush.msra.mxu0 0.0
        %943 = vmatpush.msra.mxu0 0.0
        %944 = vmatpush.msra.mxu0 0.0
        %945 = vmatpush.msra.mxu0 0.0
        %946 = vmatpush.msra.mxu0 0.0
        %947 = vmatpush.msra.mxu0 0.0
        %948 = vmatpush.msra.mxu0 %v928
        %949 = vmatmul.f32.gmra.mxu0 %v931
        %v950 = vpop.f32.mrf.mxu0
        %v951 = vadd.f32 0.0, %v950
        %952 = vdwg.mxu0
        %v953 = vld [vmem:[#allocation10] sm:$0xff]
        %v954 = vld [vmem:[#allocation10 + $0x8] sm:$0xff]
        %v955 = vld [vmem:[#allocation10 + $0x10] sm:$0xff]
        %v956 = vld [vmem:[#allocation10 + $0x18] sm:$0xff]
        %v958 = vsel %vm669, %v873, 0
        %960 = vmatpush.msra.mxu0 0.0
        %961 = vmatpush.msra.mxu0 0.0
        %962 = vmatpush.msra.mxu0 0.0
        %963 = vmatpush.msra.mxu0 0.0
        %964 = vmatpush.msra.mxu0 0.0
        %965 = vmatpush.msra.mxu0 0.0
        %966 = vmatpush.msra.mxu0 0.0
        %967 = vmatpush.msra.mxu0 0.0
        %968 = vmatpush.msra.mxu0 0.0
        %969 = vmatpush.msra.mxu0 0.0
        %970 = vmatpush.msra.mxu0 0.0
        %971 = vmatpush.msra.mxu0 0.0
        %972 = vmatpush.msra.mxu0 0.0
        %973 = vmatpush.msra.mxu0 0.0
        %974 = vmatpush.msra.mxu0 0.0
        %975 = vmatpush.msra.mxu0 %v953
        %976 = vmatmul.f32.gmra.mxu0 %v958
        %v977 = vpop.f32.mrf.mxu0
        %v978 = vadd.f32 0.0, %v977
        %979 = vdwg.mxu0
        %v981 = vsel %vm669, %v899, 0
        %983 = vmatpush.msra.mxu0 0.0
        %984 = vmatpush.msra.mxu0 0.0
        %985 = vmatpush.msra.mxu0 0.0
        %986 = vmatpush.msra.mxu0 0.0
        %987 = vmatpush.msra.mxu0 0.0
        %988 = vmatpush.msra.mxu0 0.0
        %989 = vmatpush.msra.mxu0 0.0
        %990 = vmatpush.msra.mxu0 0.0
        %991 = vmatpush.msra.mxu0 0.0
        %992 = vmatpush.msra.mxu0 0.0
        %993 = vmatpush.msra.mxu0 0.0
        %994 = vmatpush.msra.mxu0 0.0
        %995 = vmatpush.msra.mxu0 0.0
        %996 = vmatpush.msra.mxu0 0.0
        %997 = vmatpush.msra.mxu0 0.0
        %998 = vmatpush.msra.mxu0 %v954
        %999 = vmatmul.f32.gmra.mxu0 %v981
        %v1000 = vpop.f32.mrf.mxu0
        %v1001 = vadd.f32 0.0, %v1000
        %1002 = vdwg.mxu0
        %v1004 = vsel %vm669, %v925, 0
        %1006 = vmatpush.msra.mxu0 0.0
        %1007 = vmatpush.msra.mxu0 0.0
        %1008 = vmatpush.msra.mxu0 0.0
        %1009 = vmatpush.msra.mxu0 0.0
        %1010 = vmatpush.msra.mxu0 0.0
        %1011 = vmatpush.msra.mxu0 0.0
        %1012 = vmatpush.msra.mxu0 0.0
        %1013 = vmatpush.msra.mxu0 0.0
        %1014 = vmatpush.msra.mxu0 0.0
        %1015 = vmatpush.msra.mxu0 0.0
        %1016 = vmatpush.msra.mxu0 0.0
        %1017 = vmatpush.msra.mxu0 0.0
        %1018 = vmatpush.msra.mxu0 0.0
        %1019 = vmatpush.msra.mxu0 0.0
        %1020 = vmatpush.msra.mxu0 0.0
        %1021 = vmatpush.msra.mxu0 %v955
        %1022 = vmatmul.f32.gmra.mxu0 %v1004
        %v1023 = vpop.f32.mrf.mxu0
        %v1024 = vadd.f32 0.0, %v1023
        %1025 = vdwg.mxu0
        %v1027 = vsel %vm669, %v951, 0
        %1029 = vmatpush.msra.mxu0 0.0
        %1030 = vmatpush.msra.mxu0 0.0
        %1031 = vmatpush.msra.mxu0 0.0
        %1032 = vmatpush.msra.mxu0 0.0
        %1033 = vmatpush.msra.mxu0 0.0
        %1034 = vmatpush.msra.mxu0 0.0
        %1035 = vmatpush.msra.mxu0 0.0
        %1036 = vmatpush.msra.mxu0 0.0
        %1037 = vmatpush.msra.mxu0 0.0
        %1038 = vmatpush.msra.mxu0 0.0
        %1039 = vmatpush.msra.mxu0 0.0
        %1040 = vmatpush.msra.mxu0 0.0
        %1041 = vmatpush.msra.mxu0 0.0
        %1042 = vmatpush.msra.mxu0 0.0
        %1043 = vmatpush.msra.mxu0 0.0
        %1044 = vmatpush.msra.mxu0 %v956
        %1045 = vmatmul.f32.gmra.mxu0 %v1027
        %v1046 = vpop.f32.mrf.mxu0
        %v1047 = vadd.f32 0.0, %v1046
        %1048 = vdwg.mxu0
        %v1049 = vsel %vm605, %v978, 0.0
        %v1050 = vsel %vm605, %v1001, 0.0
        %v1051 = vadd.f32 %v1049, %v1050
        %v1052 = vsel %vm605, %v1024, 0.0
        %v1053 = vadd.f32 %v1051, %v1052
        %v1054 = vsel %vm605, %v1047, 0.0
        %v1055 = vadd.f32 %v1053, %v1054
        %v1056 = vld [vmem:[%s8] sm:$0x1]
        %v1058 = vperm.slane %v1056, 0
        %v1060 = vadd.f32 %v1055, %v1058
        %v1061 = vadd.f32 %v1060, %v600
        %v1062 = vsel %vm605, %v1061, 0.0
        %1063 = vadd.xlane.f32.xlu0 %v1062
        %v1064 = vpop.xlane.xlu0 %1063
        %v1065 = vrcp.pop 32.0
        %v1066 = vmul.f32 32.0, %v1065
        %v1067 = vsub.f32 1.0, %v1066
        %v1068 = vmul.f32 %v1065, %v1067
        %v1069 = vadd.f32 %v1065, %v1068
        %vm1070 = vweird.f32 %v1065
        %v1071 = vsel %vm1070, %v1065, %v1069
        %v1072 = vmul.f32 %v1064, %v1071
        %v1073 = vsub.f32 %v1061, %v1072
        %v1074 = vmul.f32 %v1073, %v1073
        %v1075 = vsel %vm605, %v1074, 0.0
        %1076 = vadd.xlane.f32.xlu0 %v1075
        %v1077 = vpop.xlane.xlu0 %1076
        %v1078 = vmul.f32 %v1077, %v1071
        %v1079 = vadd.f32 %v1078, 1e-12
        %v1080 = vrsqrt.pop %v1079
        %v1081 = vmul.f32 %v1080, %v1079
        %v1082 = vmul.f32 %v1081, %v1080
        %v1083 = vmul.f32 0.5, %v1082
        %v1084 = vsub.f32 1.5, %v1083
        %v1085 = vmul.f32 %v1080, %v1084
        %vm1086 = vweird.f32 %v1079
        %vm1087 = vweird.f32 %v1080
        %vm1088 = vmor %vm1086, %vm1087
        %v1089 = vsel %vm1088, %v1080, %v1085
        %v1090 = vmul.f32 %v1073, %v1089
        %v1091 = vld [vmem:[%s9] sm:$0x1]
        %v1093 = vperm.slane %v1091, 0
        %v1095 = vmul.f32 %v1090, %v1093
        %v1096 = vld [vmem:[#allocation11] sm:$0x1]
        %v1098 = vperm.slane %v1096, 0
        %v1100 = vadd.f32 %v1095, %v1098
        %1101 = vst.msk [vmem:[%s592] sm:$0xff] %vm605, %v1100
        %s1102 = sand.u32 %s294, 1
        %s1103 = scalar_lea.sflag [#allocation4], %s1102
        %s1104 = sand.u32 %s294, 1
        %s1105 = smul.addr %s1104, 8
        %s1106 = scalar_lea.vmem [#allocation13], %s1105
        %s1107 = sand.u32 %s320, 1
        %s1108 = scalar_lea.sflag [#allocation15], %s1107
        %s1109 = sand.u32 %s320, 1
        %s1110 = smul.addr %s1109, 32
        %s1111 = scalar_lea.vmem [#allocation14], %s1110
        // Predicated region
        $region93: #{layoutlmv2_attention.1} parent=63 // pred_check
          %p1112 = pneg %p304
        $region94: #{layoutlmv2_attention.1} parent=63 // pred_check_branch
          %1114 = sbr.rel (%p1112) target = $region96
        $region95: #{layoutlmv2_attention.1} parent=63 // pred_region
          %1116 = vsyncadd %s1103, 0
          %s1117 = smul.addr %s35, 8
          %s1118 = scalar_lea.hbm %s11, %s1117
          %s1120 = sshll.u32 %s1106, 4
          %s1121 = int_to_ptr.vmem [resolvable:$true] %s1120
          %s1122 = sshll.u32 %s1118, 4
          %s1123 = int_to_ptr.hbm [resolvable:$true] %s1122
          %1125 = dma.vmem_to_hbm [thread:$0]  %s1121, 128, %s1123, %s1103
        $region96: #{layoutlmv2_attention.1} parent=63 // pred_fallthru
          _
        // Predicated region
        $region97: #{layoutlmv2_attention.1} parent=63 // pred_check
          %p1126 = pneg %p330
        $region98: #{layoutlmv2_attention.1} parent=63 // pred_check_branch
          %1128 = sbr.rel (%p1126) target = $region100
        $region99: #{layoutlmv2_attention.1} parent=63 // pred_region
          %1130 = vsyncadd %s1108, 0
          %s1131 = smul.addr %s35, 4
          %s1132 = smul.addr %s1131, 8
          %s1133 = scalar_lea.hbm %s12, %s1132
          %s1134 = sshll.u32 %s1111, 4
          %s1135 = int_to_ptr.vmem [resolvable:$true] %s1134
          %s1136 = sshll.u32 %s1133, 4
          %s1137 = int_to_ptr.hbm [resolvable:$true] %s1136
          %1142 = dma.vmem_to_hbm [thread:$0]  %s1135, 512, %s1137, %s1108, 128, 128, 8
        $region100: #{layoutlmv2_attention.1} parent=63 // pred_fallthru
          _
      $region64: #{layoutlmv2_attention.1} parent=5 // pred_fallthru
        _
      %p1143 = scmp.le.s32.totalorder 2, %s30
      // Predicated region
      $region101: #{layoutlmv2_attention.1} parent=5 // pred_check
        %p1144 = pneg %p1143
      $region102: #{layoutlmv2_attention.1} parent=5 // pred_check_branch
        %1146 = sbr.rel (%p1144) target = $region104
      $region103: #{layoutlmv2_attention.1} parent=5 // pred_region
        %s1147 = ssub.s32 %s30, 2
        // Predicated region
        $region105: #{layoutlmv2_attention.1} parent=103 // pred_check
          %p1148 = pneg %p310
        $region106: #{layoutlmv2_attention.1} parent=103 // pred_check_branch
          %1150 = sbr.rel (%p1148) target = $region108
        $region107: #{layoutlmv2_attention.1} parent=103 // pred_region
          %s1151 = sand.u32 %s295, 1
          %s1152 = scalar_lea.sflag [#allocation4], %s1151
          %s1153 = sand.u32 %s295, 1
          %s1154 = smul.addr %s1153, 8
          %s1155 = scalar_lea.vmem [#allocation13], %s1154
          %1157 = dma.done %s1152, 128
        $region108: #{layoutlmv2_attention.1} parent=103 // pred_fallthru
          _
        // Predicated region
        $region109: #{layoutlmv2_attention.1} parent=103 // pred_check
          %p1158 = pneg %p336
        $region110: #{layoutlmv2_attention.1} parent=103 // pred_check_branch
          %1160 = sbr.rel (%p1158) target = $region112
        $region111: #{layoutlmv2_attention.1} parent=103 // pred_region
          %s1161 = sand.u32 %s321, 1
          %s1162 = scalar_lea.sflag [#allocation15], %s1161
          %s1163 = sand.u32 %s321, 1
          %s1164 = smul.addr %s1163, 32
          %s1165 = scalar_lea.vmem [#allocation14], %s1164
          %1167 = dma.done %s1162, 512
        $region112: #{layoutlmv2_attention.1} parent=103 // pred_fallthru
          _
      $region104: #{layoutlmv2_attention.1} parent=5 // pred_fallthru
        _
    $region6: #{layoutlmv2_attention.1} parent=1 // loop_footer
      %s34 = sadd.s32 1, %s30
    $region7: #{layoutlmv2_attention.1} parent=1 // loop_footer_branch
      %29 = sbr.rel target = $region3
    $region8: #{layoutlmv2_attention.1} parent=1 // loop_exit
      _
    %1168 = vsyncpa [#allocation3], 1
    %s1169 = scalar_lea.sflag [#allocation3], 1
    %1170 = vsyncpa %s1169, 1
    %1171 = vsyncpa [#allocation6], 1
    %1172 = vsyncpa [#allocation12], 1
    %1173 = vsyncpa [#allocation4], 1
    %s1174 = scalar_lea.sflag [#allocation4], 1
    %1175 = vsyncpa %s1174, 1
    %1176 = vsyncpa [#allocation15], 1
    %s1177 = scalar_lea.sflag [#allocation15], 1
    %1178 = vsyncpa %s1177, 1

</llo_original>
